<compile_context>
chip_gen: v6e
topology: v6e:2x2x1
jax: 0.10.0
libtpu: 0.0.40
codegen_flags: <defaults>
</compile_context>

<pallas_src>
import jax
import jax.numpy as jnp
from jax import lax
from jax.experimental import pallas as pl
from jax.experimental.pallas import tpu as pltpu

HEADS = 4
DIM_HEAD = 32
EPS = 1e-5

# row indices inside the packed per-channel parameter table (8, Cout)
_B1, _G1, _BE1, _B2, _G2, _BE2, _BOUT, _BRES = range(8)


# ----------------------------- in-kernel helpers -----------------------------
def _mish(x):
    # x * tanh(softplus(x)) == x * (1 - 2 / ((1 + e^x)^2 + 1)); stable for large |x|
    u = 1.0 + jnp.exp(x)
    return x * (1.0 - 2.0 / (u * u + 1.0))


def _gn_mish(seg, gamma_row, beta_row):
    # GroupNorm(num_groups=1) over one sample's [H, C] slab; fused single-pass stats.
    n = seg.shape[0] * seg.shape[1]
    s1 = jnp.sum(seg, keepdims=True)
    s2 = jnp.sum(seg * seg, keepdims=True)
    mu = s1 * (1.0 / n)
    var = s2 * (1.0 / n) - mu * mu
    y = (seg - mu) * lax.rsqrt(var + EPS) * gamma_row + beta_row
    return _mish(y)


def _softmax_axis0(x):
    # softmax over the n (sublane) axis, independently per column
    m = jnp.max(x, axis=0, keepdims=True)
    e = jnp.exp(x - m)
    return e * pl.reciprocal(jnp.sum(e, axis=0, keepdims=True), approx=True)


def _conv_taps(sample, K):
    # sample: [H, C] f32 -> [H, K*C] replicate-padded tap slab (tap-major columns:
    # column k*C + ci == sample[clip(t + k - pad, 0, H-1), ci])
    H, C = sample.shape
    pad = K // 2
    if pad == 0:
        return sample
    padded = jnp.concatenate(
        [jnp.broadcast_to(sample[0:1, :], (pad, C)),
         sample,
         jnp.broadcast_to(sample[H - 1:H, :], (pad, C))], axis=0)       # [H + 2*pad, C]
    return jnp.concatenate([padded[k:k + H, :] for k in range(K)], axis=1)


# --------------------------------- kernel ------------------------------------
def _make_kernel(NB, H, K, heads, dim_head, has_res):
    hid = heads * dim_head

    def kernel(*refs):
        if has_res:
            (x_ref, tf_ref, w1_ref, w2_ref, wqkv_ref, wout_ref, wres_ref,
             vec_ref, o_ref) = refs
        else:
            (x_ref, tf_ref, w1_ref, w2_ref, wqkv_ref, wout_ref,
             vec_ref, o_ref) = refs
            wres_ref = None

        x_bf = x_ref[...]                         # [NB*H, Cin] bf16 (streamed)
        x_f = x_bf.astype(jnp.float32)
        tf = tf_ref[0]                            # [NB, Cout]  f32
        vec = vec_ref[...]                        # [8,  Cout]  f32

        # ---- block 0: Conv1d (replicate pad) -> GroupNorm(1) -> Mish, + time embedding ----
        slab1_parts = [_conv_taps(x_f[nb * H:(nb + 1) * H, :], K) for nb in range(NB)]
        slab1 = jnp.concatenate(slab1_parts, axis=0) if NB > 1 else slab1_parts[0]
        h1 = jnp.dot(slab1.astype(jnp.bfloat16), w1_ref[...],
                     preferred_element_type=jnp.float32) + vec[_B1:_B1 + 1, :]

        # per-sample GroupNorm/Mish + time add, directly staged into the conv-2 tap slab
        slab2_parts = []
        for nb in range(NB):
            seg = _gn_mish(h1[nb * H:(nb + 1) * H, :],
                           vec[_G1:_G1 + 1, :], vec[_BE1:_BE1 + 1, :])
            seg = seg + tf[nb:nb + 1, :]
            slab2_parts.append(_conv_taps(seg, K))
        slab2 = jnp.concatenate(slab2_parts, axis=0) if NB > 1 else slab2_parts[0]

        # ---- block 1: Conv1d -> GroupNorm(1) -> Mish ----
        h2 = jnp.dot(slab2.astype(jnp.bfloat16), w2_ref[...],
                     preferred_element_type=jnp.float32) + vec[_B2:_B2 + 1, :]
        y_parts = [_gn_mish(h2[nb * H:(nb + 1) * H, :],
                            vec[_G2:_G2 + 1, :], vec[_BE2:_BE2 + 1, :])
                   for nb in range(NB)]
        y = jnp.concatenate(y_parts, axis=0) if NB > 1 else y_parts[0]   # [NB*H, Cout] f32

        # ---- Residual(LinearAttention): w == 1, so n == horizon; per-sample attention ----
        qkv = jnp.dot(y.astype(jnp.bfloat16), wqkv_ref[...],
                      preferred_element_type=jnp.float32)                # [NB*H, 3*hid]
        attn_parts = []
        for nb in range(NB):
            base = nb * H
            q_nb = qkv[base:base + H, 0:hid].astype(jnp.bfloat16)
            k_nb = _softmax_axis0(qkv[base:base + H, hid:2 * hid]).astype(jnp.bfloat16)
            v_nb = qkv[base:base + H, 2 * hid:3 * hid].astype(jnp.bfloat16)
            head_parts = []
            for h in range(heads):
                cs = slice(h * dim_head, (h + 1) * dim_head)
                # context[d, e] = sum_n k[n, d] * v[n, e]
                context = lax.dot_general(k_nb[:, cs], v_nb[:, cs],
                                          (((0,), (0,)), ((), ())),
                                          preferred_element_type=jnp.float32)   # [dh, dh]
                # out[n, e] = sum_d q[n, d] * context[d, e]
                head_parts.append(jnp.dot(q_nb[:, cs], context.astype(jnp.bfloat16),
                                          preferred_element_type=jnp.float32))  # [H, dh]
            attn_parts.append(jnp.concatenate(head_parts, axis=1))               # [H, hid]
        attn_in = jnp.concatenate(attn_parts, axis=0) if NB > 1 else attn_parts[0]
        attn = jnp.dot(attn_in.astype(jnp.bfloat16), wout_ref[...],
                       preferred_element_type=jnp.float32) + vec[_BOUT:_BOUT + 1, :]

        # ---- residual path: 1x1 conv (Cin != Cout) or identity (Cin == Cout, no matmul) ----
        if has_res:
            res = jnp.dot(x_bf, wres_ref[...],
                          preferred_element_type=jnp.float32) + vec[_BRES:_BRES + 1, :]
        else:
            res = x_f

        o_ref[...] = (y + attn + res).astype(o_ref.dtype)

    return kernel


# --------------------------------- wrapper -----------------------------------
def _full_spec(shape):
    n = len(shape)
    return pl.BlockSpec(shape, lambda i, _n=n: (0,) * _n)


def _pick_nb(B, H, max_rows=512):
    # pack NB samples per grid step: rows = NB*H amortizes per-step overhead and fills MXU
    # rows, but keep the grid even when possible (v7x: 2 TensorCores) and the sublane block
    # dim a multiple of 8 (or the full array).
    cands = [nb for nb in range(1, B + 1)
             if B % nb == 0 and nb * H <= max_rows and ((nb * H) % 8 == 0 or nb == B)]
    if not cands:
        cands = [B]

    def score(nb):
        g = B // nb
        return (g >= 2 and g % 2 == 0, nb)

    return max(cands, key=score)


def _vmem_estimate_bytes(rows, NB, Cin, Cout, K, hid):
    tiles = 2 * rows * Cin * 2 + 2 * rows * Cout * 4 + 2 * NB * Cout * 4       # double-buffered I/O
    weights = 2 * 2 * (K * Cin * Cout + K * Cout * Cout + Cout * 3 * hid
                       + hid * Cout + Cin * Cout) + 2 * 8 * Cout * 4
    temps = rows * K * max(Cin, Cout) * 4 + rows * 3 * hid * 4 + rows * hid * 4 + 4 * rows * Cout * 4
    return tiles + weights + temps


def residual_temporal_block(x, t, p):
    B, Cin, H = x.shape
    Cout, _, K = p["w1"].shape
    hid = HEADS * DIM_HEAD
    has_res = Cin != Cout                      # nn.Identity when channels match

    NB = _pick_nb(B, H)
    grid = (B // NB,)
    rows = NB * H

    # time MLP (Mish -> Linear) precomputed in plain XLA, shipped as a [NB, Cout] block/step
    tm = t * jnp.tanh(jax.nn.softplus(t))
    tfeat = (tm @ p["wt"].T + p["bt"][None, :]).astype(jnp.float32).reshape(B // NB, NB, Cout)

    # weights: conv kernels flattened tap-major to [K*C, Cout]; all matmul RHS are [K, N] bf16
    w1f = jnp.transpose(p["w1"], (2, 1, 0)).reshape(K * Cin, Cout).astype(jnp.bfloat16)
    w2f = jnp.transpose(p["w2"], (2, 1, 0)).reshape(K * Cout, Cout).astype(jnp.bfloat16)
    wqkvT = jnp.transpose(p["wqkv"]).astype(jnp.bfloat16)      # [Cout, 3*hid]
    woutT = jnp.transpose(p["wout"]).astype(jnp.bfloat16)      # [hid, Cout]

    bres = p.get("bres", jnp.zeros((Cout,), jnp.float32))
    vec = jnp.stack([p["b1"], p["g1"], p["be1"], p["b2"], p["g2"], p["be2"],
                     p["bout"], bres], axis=0).astype(jnp.float32)          # [8, Cout]

    # activations: [batch*horizon, channels] so channels sit on lanes; streamed in bf16
    xt = jnp.transpose(x, (0, 2, 1)).reshape(B * H, Cin).astype(jnp.bfloat16)

    in_specs = [
        pl.BlockSpec((rows, Cin), lambda i: (i, 0)),
        pl.BlockSpec((1, NB, Cout), lambda i: (i, 0, 0)),
        _full_spec((K * Cin, Cout)),
        _full_spec((K * Cout, Cout)),
        _full_spec((Cout, 3 * hid)),
        _full_spec((hid, Cout)),
    ]
    args = [xt, tfeat, w1f, w2f, wqkvT, woutT]
    if has_res:
        wresT = jnp.transpose(p["wres"]).astype(jnp.bfloat16)  # [Cin, Cout]
        in_specs.append(_full_spec((Cin, Cout)))
        args.append(wresT)
    in_specs.append(_full_spec((8, Cout)))
    args.append(vec)

    # raise the scoped-VMEM limit only when the packed tile actually needs it (v5e default 16 MiB)
    est = _vmem_estimate_bytes(rows, NB, Cin, Cout, K, hid)
    vmem_limit = int(min(2 * est, 64 * 2 ** 20)) if 2 * est > 24 * 2 ** 20 else None

    out2d = pl.pallas_call(
        _make_kernel(NB, H, K, HEADS, DIM_HEAD, has_res),
        out_shape=jax.ShapeDtypeStruct((B * H, Cout), jnp.float32),
        grid_spec=pltpu.PrefetchScalarGridSpec(
            num_scalar_prefetch=0,
            grid=grid,
            in_specs=in_specs,
            out_specs=pl.BlockSpec((rows, Cout), lambda i: (i, 0)),
        ),
        compiler_params=pltpu.CompilerParams(
            dimension_semantics=("parallel",),
            vmem_limit_bytes=vmem_limit,
        ),
    )(*args)

    return jnp.transpose(out2d.reshape(B, H, Cout), (0, 2, 1)).astype(x.dtype)


# ------------------------------ params ---------------------------------------
def make_params(key, Cin, Cout, E, K):
    hid = HEADS * DIM_HEAD
    ks = jax.random.split(key, 16)

    def rnd(k, shape, scale=0.1):
        w = scale * jax.random.normal(k, shape, jnp.float32)
        # keep values bf16-representable so the kernel's bf16 weight cast is lossless
        return w.astype(jnp.bfloat16).astype(jnp.float32)

    p = {
        "w1": rnd(ks[0], (Cout, Cin, K)),      # PyTorch Conv1d layout [Cout, Cin, K]
        "b1": rnd(ks[1], (Cout,)),
        "g1": 1.0 + rnd(ks[2], (Cout,)),
        "be1": rnd(ks[3], (Cout,)),
        "w2": rnd(ks[4], (Cout, Cout, K)),
        "b2": rnd(ks[5], (Cout,)),
        "g2": 1.0 + rnd(ks[6], (Cout,)),
        "be2": rnd(ks[7], (Cout,)),
        "wt": rnd(ks[8], (Cout, E)),
        "bt": rnd(ks[9], (Cout,)),
        "wqkv": rnd(ks[10], (3 * hid, Cout)),
        "wout": rnd(ks[11], (Cout, hid)),
        "bout": rnd(ks[12], (Cout,)),
    }
    if Cin != Cout:                            # nn.Identity otherwise: no wres/bres at all
        p["wres"] = rnd(ks[13], (Cout, Cin))
        p["bres"] = rnd(ks[14], (Cout,))
    return p


# ------------------------------ pure-JAX reference ---------------------------
def _forward_ref(x, t, p):
    def mish(v):
        return v * jnp.tanh(jax.nn.softplus(v))

    def conv1d(v, w, b):  # v [B,C,H], w [Cout,Cin,K], b [Cout]; replicate padding
        K = w.shape[-1]
        pad = K // 2
        H = v.shape[2]
        vp = jnp.pad(v, ((0, 0), (0, 0), (pad, pad)), mode="edge")
        out = jnp.zeros((v.shape[0], w.shape[0], H), jnp.float32) + b[None, :, None]
        for k in range(K):
            out = out + jnp.einsum("oc,bch->boh", w[:, :, k], vp[:, :, k:k + H])
        return out

    def gn(v, g, be):
        mu = v.mean(axis=(1, 2), keepdims=True)
        var = ((v - mu) ** 2).mean(axis=(1, 2), keepdims=True)
        return (v - mu) / jnp.sqrt(var + EPS) * g[None, :, None] + be[None, :, None]

    y = mish(gn(conv1d(x, p["w1"], p["b1"]), p["g1"], p["be1"]))
    tf = mish(t) @ p["wt"].T + p["bt"][None, :]
    y = y + tf[:, :, None]
    y = mish(gn(conv1d(y, p["w2"], p["b2"]), p["g2"], p["be2"]))

    B, C, H = y.shape
    hid = HEADS * DIM_HEAD
    qkv = jnp.einsum("qc,bch->bqh", p["wqkv"], y)
    q = qkv[:, :hid].reshape(B, HEADS, DIM_HEAD, H)
    k = qkv[:, hid:2 * hid].reshape(B, HEADS, DIM_HEAD, H)
    v = qkv[:, 2 * hid:].reshape(B, HEADS, DIM_HEAD, H)
    k = jax.nn.softmax(k, axis=-1)
    context = jnp.einsum("bhdn,bhen->bhde", k, v)
    out = jnp.einsum("bhde,bhdn->bhen", context, q).reshape(B, hid, H)
    attn = jnp.einsum("oc,bch->boh", p["wout"], out) + p["bout"][None, :, None]
    y = attn + y
    if "wres" in p:
        res = jnp.einsum("oc,bch->boh", p["wres"], x) + p["bres"][None, :, None]
    else:
        res = x
    return y + res


# ----------------------------------- main ------------------------------------
if __name__ == "__main__":
    B, Cin, Cout, E, H, K = 2, 4, 8, 16, 16, 5
    key = jax.random.PRNGKey(0)
    kx, kt, kp, kp2 = jax.random.split(key, 4)
    # bf16-representable test input so the kernel's bf16 streaming of x is lossless
    x = jax.random.normal(kx, (B, Cin, H), jnp.float32).astype(jnp.bfloat16).astype(jnp.float32)
    t = jax.random.normal(kt, (B, E), jnp.float32)

    # path 1: Cin != Cout -> residual 1x1 conv
    params = make_params(kp, Cin, Cout, E, K)
    out = jax.block_until_ready(residual_temporal_block(x, t, params))
    assert out.shape == (B, Cout, H)
    ref = _forward_ref(x, t, params)
    err = float(jnp.max(jnp.abs(out - ref)))
    # kernel matmuls run on the MXU in bf16 (f32 accumulation); reference is pure f32
    if err > 3e-2:
        raise AssertionError(f"mismatch (conv residual path), max abs err = {err}")

    # path 2: Cin == Cout -> nn.Identity residual (no wres matmul in the kernel)
    params_id = make_params(kp2, Cout, Cout, E, K)
    x_id = jax.random.normal(kx, (B, Cout, H), jnp.float32).astype(jnp.bfloat16).astype(jnp.float32)
    out_id = jax.block_until_ready(residual_temporal_block(x_id, t, params_id))
    ref_id = _forward_ref(x_id, t, params_id)
    err_id = float(jnp.max(jnp.abs(out_id - ref_id)))
    if err_id > 3e-2:
        raise AssertionError(f"mismatch (identity residual path), max abs err = {err_id}")

    print("KERNEL_OK")
</pallas_src>

<mosaic_0001>
module attributes {stable_mosaic.version = 11 : i64} {
  func.func @kernel(%arg0: i32, %arg1: memref<16x4xbf16, #tpu.memory_space<vmem>>, %arg2: memref<1x1x8xf32, #tpu.memory_space<vmem>>, %arg3: memref<20x8xbf16, #tpu.memory_space<vmem>>, %arg4: memref<40x8xbf16, #tpu.memory_space<vmem>>, %arg5: memref<8x384xbf16, #tpu.memory_space<vmem>>, %arg6: memref<128x8xbf16, #tpu.memory_space<vmem>>, %arg7: memref<4x8xbf16, #tpu.memory_space<vmem>>, %arg8: memref<8x8xf32, #tpu.memory_space<vmem>>, %arg9: memref<16x8xf32, #tpu.memory_space<vmem>>) attributes {dimension_semantics = [#tpu.dimension_semantics<parallel>], iteration_bounds = array<i64: 2>, scalar_prefetch = 0 : i64, scratch_operands = 0 : i64, tpu.core_type = #tpu.core_type<tc>, window_params = [{transform_indices = @transform_0, window_bounds = array<i64: 16, 4>}, {transform_indices = @transform_1, window_bounds = array<i64: 1, 1, 8>}, {pipeline_mode = #tpu.pipeline_mode<synchronous>, transform_indices = @transform_2, window_bounds = array<i64: 20, 8>}, {pipeline_mode = #tpu.pipeline_mode<synchronous>, transform_indices = @transform_3, window_bounds = array<i64: 40, 8>}, {pipeline_mode = #tpu.pipeline_mode<synchronous>, transform_indices = @transform_4, window_bounds = array<i64: 8, 384>}, {pipeline_mode = #tpu.pipeline_mode<synchronous>, transform_indices = @transform_5, window_bounds = array<i64: 128, 8>}, {pipeline_mode = #tpu.pipeline_mode<synchronous>, transform_indices = @transform_6, window_bounds = array<i64: 4, 8>}, {pipeline_mode = #tpu.pipeline_mode<synchronous>, transform_indices = @transform_7, window_bounds = array<i64: 8, 8>}, {transform_indices = @transform_8, window_bounds = array<i64: 16, 8>}]} {
    %c0 = arith.constant 0 : index
    %c0_0 = arith.constant 0 : index
    %0 = vector.load %arg1[%c0, %c0_0] : memref<16x4xbf16, #tpu.memory_space<vmem>>, vector<16x4xbf16>
    %1 = arith.extf %0 : vector<16x4xbf16> to vector<16x4xf32>
    %c0_1 = arith.constant 0 : index
    %c0_2 = arith.constant 0 : index
    %c0_3 = arith.constant 0 : index
    %2 = vector.load %arg2[%c0_1, %c0_2, %c0_3] : memref<1x1x8xf32, #tpu.memory_space<vmem>>, vector<1x1x8xf32>
    %3 = vector.shape_cast %2 : vector<1x1x8xf32> to vector<1x8xf32>
    %c0_4 = arith.constant 0 : index
    %c0_5 = arith.constant 0 : index
    %4 = vector.load %arg8[%c0_4, %c0_5] : memref<8x8xf32, #tpu.memory_space<vmem>>, vector<8x8xf32>
    %5 = vector.extract_strided_slice %1 {offsets = [0, 0], sizes = [1, 4], strides = [1, 1]} : vector<16x4xf32> to vector<1x4xf32>
    %6 = vector.shape_cast %5 : vector<1x4xf32> to vector<1x4xf32>
    %7 = vector.broadcast %6 : vector<1x4xf32> to vector<2x4xf32>
    %8 = vector.extract_strided_slice %1 {offsets = [15, 0], sizes = [1, 4], strides = [1, 1]} : vector<16x4xf32> to vector<1x4xf32>
    %9 = vector.shape_cast %8 : vector<1x4xf32> to vector<1x4xf32>
    %10 = vector.broadcast %9 : vector<1x4xf32> to vector<2x4xf32>
    %11 = tpu.concatenate %7, %1, %10 in 0 : vector<2x4xf32>, vector<16x4xf32>, vector<2x4xf32> -> vector<20x4xf32>
    %12 = vector.extract_strided_slice %11 {offsets = [0, 0], sizes = [16, 4], strides = [1, 1]} : vector<20x4xf32> to vector<16x4xf32>
    %13 = vector.extract_strided_slice %11 {offsets = [1, 0], sizes = [16, 4], strides = [1, 1]} : vector<20x4xf32> to vector<16x4xf32>
    %14 = vector.extract_strided_slice %11 {offsets = [2, 0], sizes = [16, 4], strides = [1, 1]} : vector<20x4xf32> to vector<16x4xf32>
    %15 = vector.extract_strided_slice %11 {offsets = [3, 0], sizes = [16, 4], strides = [1, 1]} : vector<20x4xf32> to vector<16x4xf32>
    %16 = vector.extract_strided_slice %11 {offsets = [4, 0], sizes = [16, 4], strides = [1, 1]} : vector<20x4xf32> to vector<16x4xf32>
    %17 = tpu.concatenate %12, %13, %14, %15, %16 in 1 : vector<16x4xf32>, vector<16x4xf32>, vector<16x4xf32>, vector<16x4xf32>, vector<16x4xf32> -> vector<16x20xf32>
    %18 = arith.truncf %17 : vector<16x20xf32> to vector<16x20xbf16>
    %c0_6 = arith.constant 0 : index
    %c0_7 = arith.constant 0 : index
    %19 = vector.load %arg3[%c0_6, %c0_7] : memref<20x8xbf16, #tpu.memory_space<vmem>>, vector<20x8xbf16>
    %cst = arith.constant dense<0.000000e+00> : vector<16x8xf32>
    %20 = tpu.matmul %18, %19, %cst {dimension_numbers = #tpu.dot_dimension_numbers<[1], [0], [0], [1], [0, 0, 1, 1], [], []>} : vector<16x20xbf16>, vector<20x8xbf16>, vector<16x8xf32> -> vector<16x8xf32>
    %21 = vector.extract_strided_slice %4 {offsets = [0, 0], sizes = [1, 8], strides = [1, 1]} : vector<8x8xf32> to vector<1x8xf32>
    %22 = vector.broadcast %21 : vector<1x8xf32> to vector<16x8xf32>
    %23 = arith.addf %20, %22 : vector<16x8xf32>
    %24 = vector.extract_strided_slice %4 {offsets = [1, 0], sizes = [1, 8], strides = [1, 1]} : vector<8x8xf32> to vector<1x8xf32>
    %25 = vector.extract_strided_slice %4 {offsets = [2, 0], sizes = [1, 8], strides = [1, 1]} : vector<8x8xf32> to vector<1x8xf32>
    %26 = vector.shape_cast %23 : vector<16x8xf32> to vector<1x16x8xf32>
    %cst_8 = arith.constant dense<0.000000e+00> : vector<1xf32>
    %27 = vector.multi_reduction <add>, %26, %cst_8 [1, 2] : vector<1x16x8xf32> to vector<1xf32>
    %28 = vector.shape_cast %27 : vector<1xf32> to vector<1x1x1xf32>
    %29 = vector.extract %28[0, 0, 0] : f32 from vector<1x1x1xf32>
    %30 = vector.broadcast %29 : f32 to vector<1x1xf32>
    %31 = arith.mulf %23, %23 : vector<16x8xf32>
    %32 = vector.shape_cast %31 : vector<16x8xf32> to vector<1x16x8xf32>
    %cst_9 = arith.constant dense<0.000000e+00> : vector<1xf32>
    %33 = vector.multi_reduction <add>, %32, %cst_9 [1, 2] : vector<1x16x8xf32> to vector<1xf32>
    %34 = vector.shape_cast %33 : vector<1xf32> to vector<1x1x1xf32>
    %35 = vector.extract %34[0, 0, 0] : f32 from vector<1x1x1xf32>
    %36 = vector.broadcast %35 : f32 to vector<1x1xf32>
    %cst_10 = arith.constant 7.812500e-03 : f32
    %37 = vector.broadcast %cst_10 : f32 to vector<1x1xf32>
    %38 = arith.mulf %30, %37 : vector<1x1xf32>
    %cst_11 = arith.constant 7.812500e-03 : f32
    %39 = vector.broadcast %cst_11 : f32 to vector<1x1xf32>
    %40 = arith.mulf %36, %39 : vector<1x1xf32>
    %41 = arith.mulf %38, %38 : vector<1x1xf32>
    %42 = arith.subf %40, %41 : vector<1x1xf32>
    %43 = vector.broadcast %38 : vector<1x1xf32> to vector<16x8xf32>
    %44 = arith.subf %23, %43 : vector<16x8xf32>
    %cst_12 = arith.constant 9.99999974E-6 : f32
    %45 = vector.broadcast %cst_12 : f32 to vector<1x1xf32>
    %46 = arith.addf %42, %45 : vector<1x1xf32>
    %47 = math.rsqrt %46 : vector<1x1xf32>
    %48 = vector.broadcast %47 : vector<1x1xf32> to vector<16x8xf32>
    %49 = arith.mulf %44, %48 : vector<16x8xf32>
    %50 = vector.broadcast %24 : vector<1x8xf32> to vector<16x8xf32>
    %51 = arith.mulf %49, %50 : vector<16x8xf32>
    %52 = vector.broadcast %25 : vector<1x8xf32> to vector<16x8xf32>
    %53 = arith.addf %51, %52 : vector<16x8xf32>
    %54 = math.exp %53 : vector<16x8xf32>
    %cst_13 = arith.constant 1.000000e+00 : f32
    %55 = vector.broadcast %cst_13 : f32 to vector<16x8xf32>
    %56 = arith.addf %55, %54 : vector<16x8xf32>
    %57 = arith.mulf %56, %56 : vector<16x8xf32>
    %cst_14 = arith.constant 1.000000e+00 : f32
    %58 = vector.broadcast %cst_14 : f32 to vector<16x8xf32>
    %59 = arith.addf %57, %58 : vector<16x8xf32>
    %cst_15 = arith.constant 2.000000e+00 : f32
    %60 = vector.broadcast %cst_15 : f32 to vector<16x8xf32>
    %61 = arith.divf %60, %59 : vector<16x8xf32>
    %cst_16 = arith.constant 1.000000e+00 : f32
    %62 = vector.broadcast %cst_16 : f32 to vector<16x8xf32>
    %63 = arith.subf %62, %61 : vector<16x8xf32>
    %64 = arith.mulf %53, %63 : vector<16x8xf32>
    %65 = vector.broadcast %3 : vector<1x8xf32> to vector<16x8xf32>
    %66 = arith.addf %64, %65 : vector<16x8xf32>
    %67 = vector.extract_strided_slice %66 {offsets = [0, 0], sizes = [1, 8], strides = [1, 1]} : vector<16x8xf32> to vector<1x8xf32>
    %68 = vector.shape_cast %67 : vector<1x8xf32> to vector<1x8xf32>
    %69 = vector.broadcast %68 : vector<1x8xf32> to vector<2x8xf32>
    %70 = vector.extract_strided_slice %66 {offsets = [15, 0], sizes = [1, 8], strides = [1, 1]} : vector<16x8xf32> to vector<1x8xf32>
    %71 = vector.shape_cast %70 : vector<1x8xf32> to vector<1x8xf32>
    %72 = vector.broadcast %71 : vector<1x8xf32> to vector<2x8xf32>
    %73 = tpu.concatenate %69, %66, %72 in 0 : vector<2x8xf32>, vector<16x8xf32>, vector<2x8xf32> -> vector<20x8xf32>
    %74 = vector.extract_strided_slice %73 {offsets = [0, 0], sizes = [16, 8], strides = [1, 1]} : vector<20x8xf32> to vector<16x8xf32>
    %75 = vector.extract_strided_slice %73 {offsets = [1, 0], sizes = [16, 8], strides = [1, 1]} : vector<20x8xf32> to vector<16x8xf32>
    %76 = vector.extract_strided_slice %73 {offsets = [2, 0], sizes = [16, 8], strides = [1, 1]} : vector<20x8xf32> to vector<16x8xf32>
    %77 = vector.extract_strided_slice %73 {offsets = [3, 0], sizes = [16, 8], strides = [1, 1]} : vector<20x8xf32> to vector<16x8xf32>
    %78 = vector.extract_strided_slice %73 {offsets = [4, 0], sizes = [16, 8], strides = [1, 1]} : vector<20x8xf32> to vector<16x8xf32>
    %79 = tpu.concatenate %74, %75, %76, %77, %78 in 1 : vector<16x8xf32>, vector<16x8xf32>, vector<16x8xf32>, vector<16x8xf32>, vector<16x8xf32> -> vector<16x40xf32>
    %80 = arith.truncf %79 : vector<16x40xf32> to vector<16x40xbf16>
    %c0_17 = arith.constant 0 : index
    %c0_18 = arith.constant 0 : index
    %81 = vector.load %arg4[%c0_17, %c0_18] : memref<40x8xbf16, #tpu.memory_space<vmem>>, vector<40x8xbf16>
    %cst_19 = arith.constant dense<0.000000e+00> : vector<16x8xf32>
    %82 = tpu.matmul %80, %81, %cst_19 {dimension_numbers = #tpu.dot_dimension_numbers<[1], [0], [0], [1], [0, 0, 1, 1], [], []>} : vector<16x40xbf16>, vector<40x8xbf16>, vector<16x8xf32> -> vector<16x8xf32>
    %83 = vector.extract_strided_slice %4 {offsets = [3, 0], sizes = [1, 8], strides = [1, 1]} : vector<8x8xf32> to vector<1x8xf32>
    %84 = vector.broadcast %83 : vector<1x8xf32> to vector<16x8xf32>
    %85 = arith.addf %82, %84 : vector<16x8xf32>
    %86 = vector.extract_strided_slice %4 {offsets = [4, 0], sizes = [1, 8], strides = [1, 1]} : vector<8x8xf32> to vector<1x8xf32>
    %87 = vector.extract_strided_slice %4 {offsets = [5, 0], sizes = [1, 8], strides = [1, 1]} : vector<8x8xf32> to vector<1x8xf32>
    %88 = vector.shape_cast %85 : vector<16x8xf32> to vector<1x16x8xf32>
    %cst_20 = arith.constant dense<0.000000e+00> : vector<1xf32>
    %89 = vector.multi_reduction <add>, %88, %cst_20 [1, 2] : vector<1x16x8xf32> to vector<1xf32>
    %90 = vector.shape_cast %89 : vector<1xf32> to vector<1x1x1xf32>
    %91 = vector.extract %90[0, 0, 0] : f32 from vector<1x1x1xf32>
    %92 = vector.broadcast %91 : f32 to vector<1x1xf32>
    %93 = arith.mulf %85, %85 : vector<16x8xf32>
    %94 = vector.shape_cast %93 : vector<16x8xf32> to vector<1x16x8xf32>
    %cst_21 = arith.constant dense<0.000000e+00> : vector<1xf32>
    %95 = vector.multi_reduction <add>, %94, %cst_21 [1, 2] : vector<1x16x8xf32> to vector<1xf32>
    %96 = vector.shape_cast %95 : vector<1xf32> to vector<1x1x1xf32>
    %97 = vector.extract %96[0, 0, 0] : f32 from vector<1x1x1xf32>
    %98 = vector.broadcast %97 : f32 to vector<1x1xf32>
    %cst_22 = arith.constant 7.812500e-03 : f32
    %99 = vector.broadcast %cst_22 : f32 to vector<1x1xf32>
    %100 = arith.mulf %92, %99 : vector<1x1xf32>
    %cst_23 = arith.constant 7.812500e-03 : f32
    %101 = vector.broadcast %cst_23 : f32 to vector<1x1xf32>
    %102 = arith.mulf %98, %101 : vector<1x1xf32>
    %103 = arith.mulf %100, %100 : vector<1x1xf32>
    %104 = arith.subf %102, %103 : vector<1x1xf32>
    %105 = vector.broadcast %100 : vector<1x1xf32> to vector<16x8xf32>
    %106 = arith.subf %85, %105 : vector<16x8xf32>
    %cst_24 = arith.constant 9.99999974E-6 : f32
    %107 = vector.broadcast %cst_24 : f32 to vector<1x1xf32>
    %108 = arith.addf %104, %107 : vector<1x1xf32>
    %109 = math.rsqrt %108 : vector<1x1xf32>
    %110 = vector.broadcast %109 : vector<1x1xf32> to vector<16x8xf32>
    %111 = arith.mulf %106, %110 : vector<16x8xf32>
    %112 = vector.broadcast %86 : vector<1x8xf32> to vector<16x8xf32>
    %113 = arith.mulf %111, %112 : vector<16x8xf32>
    %114 = vector.broadcast %87 : vector<1x8xf32> to vector<16x8xf32>
    %115 = arith.addf %113, %114 : vector<16x8xf32>
    %116 = math.exp %115 : vector<16x8xf32>
    %cst_25 = arith.constant 1.000000e+00 : f32
    %117 = vector.broadcast %cst_25 : f32 to vector<16x8xf32>
    %118 = arith.addf %117, %116 : vector<16x8xf32>
    %119 = arith.mulf %118, %118 : vector<16x8xf32>
    %cst_26 = arith.constant 1.000000e+00 : f32
    %120 = vector.broadcast %cst_26 : f32 to vector<16x8xf32>
    %121 = arith.addf %119, %120 : vector<16x8xf32>
    %cst_27 = arith.constant 2.000000e+00 : f32
    %122 = vector.broadcast %cst_27 : f32 to vector<16x8xf32>
    %123 = arith.divf %122, %121 : vector<16x8xf32>
    %cst_28 = arith.constant 1.000000e+00 : f32
    %124 = vector.broadcast %cst_28 : f32 to vector<16x8xf32>
    %125 = arith.subf %124, %123 : vector<16x8xf32>
    %126 = arith.mulf %115, %125 : vector<16x8xf32>
    %127 = arith.truncf %126 : vector<16x8xf32> to vector<16x8xbf16>
    %c0_29 = arith.constant 0 : index
    %c0_30 = arith.constant 0 : index
    %128 = vector.load %arg5[%c0_29, %c0_30] : memref<8x384xbf16, #tpu.memory_space<vmem>>, vector<8x384xbf16>
    %cst_31 = arith.constant dense<0.000000e+00> : vector<16x384xf32>
    %129 = tpu.matmul %127, %128, %cst_31 {dimension_numbers = #tpu.dot_dimension_numbers<[1], [0], [0], [1], [0, 0, 1, 1], [], []>} : vector<16x8xbf16>, vector<8x384xbf16>, vector<16x384xf32> -> vector<16x384xf32>
    %130 = vector.extract_strided_slice %129 {offsets = [0, 0], sizes = [16, 128], strides = [1, 1]} : vector<16x384xf32> to vector<16x128xf32>
    %131 = arith.truncf %130 : vector<16x128xf32> to vector<16x128xbf16>
    %132 = vector.extract_strided_slice %129 {offsets = [0, 128], sizes = [16, 128], strides = [1, 1]} : vector<16x384xf32> to vector<16x128xf32>
    %cst_32 = arith.constant dense<0xFF800000> : vector<128xf32>
    %133 = vector.multi_reduction <maximumf>, %132, %cst_32 [0] : vector<16x128xf32> to vector<128xf32>
    %134 = vector.shape_cast %133 : vector<128xf32> to vector<1x128xf32>
    %135 = vector.broadcast %134 : vector<1x128xf32> to vector<16x128xf32>
    %136 = arith.subf %132, %135 : vector<16x128xf32>
    %137 = math.exp %136 : vector<16x128xf32>
    %cst_33 = arith.constant dense<0.000000e+00> : vector<128xf32>
    %138 = vector.multi_reduction <add>, %137, %cst_33 [0] : vector<16x128xf32> to vector<128xf32>
    %139 = vector.shape_cast %138 : vector<128xf32> to vector<1x128xf32>
    %140 = tpu.reciprocal %139 {approx = true} : vector<1x128xf32> -> vector<1x128xf32>
    %141 = vector.broadcast %140 : vector<1x128xf32> to vector<16x128xf32>
    %142 = arith.mulf %137, %141 : vector<16x128xf32>
    %143 = arith.truncf %142 : vector<16x128xf32> to vector<16x128xbf16>
    %144 = vector.extract_strided_slice %129 {offsets = [0, 256], sizes = [16, 128], strides = [1, 1]} : vector<16x384xf32> to vector<16x128xf32>
    %145 = arith.truncf %144 : vector<16x128xf32> to vector<16x128xbf16>
    %146 = vector.extract_strided_slice %143 {offsets = [0, 0], sizes = [16, 32], strides = [1, 1]} : vector<16x128xbf16> to vector<16x32xbf16>
    %147 = vector.extract_strided_slice %145 {offsets = [0, 0], sizes = [16, 32], strides = [1, 1]} : vector<16x128xbf16> to vector<16x32xbf16>
    %cst_34 = arith.constant dense<0.000000e+00> : vector<32x32xf32>
    %148 = tpu.matmul %146, %147, %cst_34 {dimension_numbers = #tpu.dot_dimension_numbers<[0], [0], [1], [1], [0, 1, 1, 1], [], []>} : vector<16x32xbf16>, vector<16x32xbf16>, vector<32x32xf32> -> vector<32x32xf32>
    %149 = vector.extract_strided_slice %131 {offsets = [0, 0], sizes = [16, 32], strides = [1, 1]} : vector<16x128xbf16> to vector<16x32xbf16>
    %150 = arith.truncf %148 : vector<32x32xf32> to vector<32x32xbf16>
    %cst_35 = arith.constant dense<0.000000e+00> : vector<16x32xf32>
    %151 = tpu.matmul %149, %150, %cst_35 {dimension_numbers = #tpu.dot_dimension_numbers<[1], [0], [0], [1], [0, 0, 1, 1], [], []>} : vector<16x32xbf16>, vector<32x32xbf16>, vector<16x32xf32> -> vector<16x32xf32>
    %152 = vector.extract_strided_slice %143 {offsets = [0, 32], sizes = [16, 32], strides = [1, 1]} : vector<16x128xbf16> to vector<16x32xbf16>
    %153 = vector.extract_strided_slice %145 {offsets = [0, 32], sizes = [16, 32], strides = [1, 1]} : vector<16x128xbf16> to vector<16x32xbf16>
    %cst_36 = arith.constant dense<0.000000e+00> : vector<32x32xf32>
    %154 = tpu.matmul %152, %153, %cst_36 {dimension_numbers = #tpu.dot_dimension_numbers<[0], [0], [1], [1], [0, 1, 1, 1], [], []>} : vector<16x32xbf16>, vector<16x32xbf16>, vector<32x32xf32> -> vector<32x32xf32>
    %155 = vector.extract_strided_slice %131 {offsets = [0, 32], sizes = [16, 32], strides = [1, 1]} : vector<16x128xbf16> to vector<16x32xbf16>
    %156 = arith.truncf %154 : vector<32x32xf32> to vector<32x32xbf16>
    %cst_37 = arith.constant dense<0.000000e+00> : vector<16x32xf32>
    %157 = tpu.matmul %155, %156, %cst_37 {dimension_numbers = #tpu.dot_dimension_numbers<[1], [0], [0], [1], [0, 0, 1, 1], [], []>} : vector<16x32xbf16>, vector<32x32xbf16>, vector<16x32xf32> -> vector<16x32xf32>
    %158 = vector.extract_strided_slice %143 {offsets = [0, 64], sizes = [16, 32], strides = [1, 1]} : vector<16x128xbf16> to vector<16x32xbf16>
    %159 = vector.extract_strided_slice %145 {offsets = [0, 64], sizes = [16, 32], strides = [1, 1]} : vector<16x128xbf16> to vector<16x32xbf16>
    %cst_38 = arith.constant dense<0.000000e+00> : vector<32x32xf32>
    %160 = tpu.matmul %158, %159, %cst_38 {dimension_numbers = #tpu.dot_dimension_numbers<[0], [0], [1], [1], [0, 1, 1, 1], [], []>} : vector<16x32xbf16>, vector<16x32xbf16>, vector<32x32xf32> -> vector<32x32xf32>
    %161 = vector.extract_strided_slice %131 {offsets = [0, 64], sizes = [16, 32], strides = [1, 1]} : vector<16x128xbf16> to vector<16x32xbf16>
    %162 = arith.truncf %160 : vector<32x32xf32> to vector<32x32xbf16>
    %cst_39 = arith.constant dense<0.000000e+00> : vector<16x32xf32>
    %163 = tpu.matmul %161, %162, %cst_39 {dimension_numbers = #tpu.dot_dimension_numbers<[1], [0], [0], [1], [0, 0, 1, 1], [], []>} : vector<16x32xbf16>, vector<32x32xbf16>, vector<16x32xf32> -> vector<16x32xf32>
    %164 = vector.extract_strided_slice %143 {offsets = [0, 96], sizes = [16, 32], strides = [1, 1]} : vector<16x128xbf16> to vector<16x32xbf16>
    %165 = vector.extract_strided_slice %145 {offsets = [0, 96], sizes = [16, 32], strides = [1, 1]} : vector<16x128xbf16> to vector<16x32xbf16>
    %cst_40 = arith.constant dense<0.000000e+00> : vector<32x32xf32>
    %166 = tpu.matmul %164, %165, %cst_40 {dimension_numbers = #tpu.dot_dimension_numbers<[0], [0], [1], [1], [0, 1, 1, 1], [], []>} : vector<16x32xbf16>, vector<16x32xbf16>, vector<32x32xf32> -> vector<32x32xf32>
    %167 = vector.extract_strided_slice %131 {offsets = [0, 96], sizes = [16, 32], strides = [1, 1]} : vector<16x128xbf16> to vector<16x32xbf16>
    %168 = arith.truncf %166 : vector<32x32xf32> to vector<32x32xbf16>
    %cst_41 = arith.constant dense<0.000000e+00> : vector<16x32xf32>
    %169 = tpu.matmul %167, %168, %cst_41 {dimension_numbers = #tpu.dot_dimension_numbers<[1], [0], [0], [1], [0, 0, 1, 1], [], []>} : vector<16x32xbf16>, vector<32x32xbf16>, vector<16x32xf32> -> vector<16x32xf32>
    %170 = tpu.concatenate %151, %157, %163, %169 in 1 : vector<16x32xf32>, vector<16x32xf32>, vector<16x32xf32>, vector<16x32xf32> -> vector<16x128xf32>
    %171 = arith.truncf %170 : vector<16x128xf32> to vector<16x128xbf16>
    %c0_42 = arith.constant 0 : index
    %c0_43 = arith.constant 0 : index
    %172 = vector.load %arg6[%c0_42, %c0_43] : memref<128x8xbf16, #tpu.memory_space<vmem>>, vector<128x8xbf16>
    %cst_44 = arith.constant dense<0.000000e+00> : vector<16x8xf32>
    %173 = tpu.matmul %171, %172, %cst_44 {dimension_numbers = #tpu.dot_dimension_numbers<[1], [0], [0], [1], [0, 0, 1, 1], [], []>} : vector<16x128xbf16>, vector<128x8xbf16>, vector<16x8xf32> -> vector<16x8xf32>
    %174 = vector.extract_strided_slice %4 {offsets = [6, 0], sizes = [1, 8], strides = [1, 1]} : vector<8x8xf32> to vector<1x8xf32>
    %175 = vector.broadcast %174 : vector<1x8xf32> to vector<16x8xf32>
    %176 = arith.addf %173, %175 : vector<16x8xf32>
    %c0_45 = arith.constant 0 : index
    %c0_46 = arith.constant 0 : index
    %177 = vector.load %arg7[%c0_45, %c0_46] : memref<4x8xbf16, #tpu.memory_space<vmem>>, vector<4x8xbf16>
    %cst_47 = arith.constant dense<0.000000e+00> : vector<16x8xf32>
    %178 = tpu.matmul %0, %177, %cst_47 {dimension_numbers = #tpu.dot_dimension_numbers<[1], [0], [0], [1], [0, 0, 1, 1], [], []>} : vector<16x4xbf16>, vector<4x8xbf16>, vector<16x8xf32> -> vector<16x8xf32>
    %179 = vector.extract_strided_slice %4 {offsets = [7, 0], sizes = [1, 8], strides = [1, 1]} : vector<8x8xf32> to vector<1x8xf32>
    %180 = vector.broadcast %179 : vector<1x8xf32> to vector<16x8xf32>
    %181 = arith.addf %178, %180 : vector<16x8xf32>
    %182 = arith.addf %126, %176 : vector<16x8xf32>
    %183 = arith.addf %182, %181 : vector<16x8xf32>
    %c0_48 = arith.constant 0 : index
    %c0_49 = arith.constant 0 : index
    %184 = vector.load %arg9[%c0_48, %c0_49] : memref<16x8xf32, #tpu.memory_space<vmem>>, vector<16x8xf32>
    tpu.vector_store %arg9[%c0_48, %c0_49], %183 {strides = array<i32>} : memref<16x8xf32, #tpu.memory_space<vmem>>, vector<16x8xf32>,
    return
  }
  func.func @transform_0(%arg0: i32) -> (i32, i32) {
    %c0_i32 = arith.constant 0 : i32
    %c0_i32_0 = arith.constant 0 : i32
    return %arg0, %c0_i32 : i32, i32
  }
  func.func @transform_1(%arg0: i32) -> (i32, i32, i32) {
    %c0_i32 = arith.constant 0 : i32
    %c0_i32_0 = arith.constant 0 : i32
    %c0_i32_1 = arith.constant 0 : i32
    return %arg0, %c0_i32, %c0_i32_0 : i32, i32, i32
  }
  func.func @transform_2(%arg0: i32) -> (i32, i32) {
    %c0_i32 = arith.constant 0 : i32
    %c0_i32_0 = arith.constant 0 : i32
    %c0_i32_1 = arith.constant 0 : i32
    return %c0_i32, %c0_i32_0 : i32, i32
  }
  func.func @transform_3(%arg0: i32) -> (i32, i32) {
    %c0_i32 = arith.constant 0 : i32
    %c0_i32_0 = arith.constant 0 : i32
    %c0_i32_1 = arith.constant 0 : i32
    return %c0_i32, %c0_i32_0 : i32, i32
  }
  func.func @transform_4(%arg0: i32) -> (i32, i32) {
    %c0_i32 = arith.constant 0 : i32
    %c0_i32_0 = arith.constant 0 : i32
    %c0_i32_1 = arith.constant 0 : i32
    return %c0_i32, %c0_i32_0 : i32, i32
  }
  func.func @transform_5(%arg0: i32) -> (i32, i32) {
    %c0_i32 = arith.constant 0 : i32
    %c0_i32_0 = arith.constant 0 : i32
    %c0_i32_1 = arith.constant 0 : i32
    return %c0_i32, %c0_i32_0 : i32, i32
  }
  func.func @transform_6(%arg0: i32) -> (i32, i32) {
    %c0_i32 = arith.constant 0 : i32
    %c0_i32_0 = arith.constant 0 : i32
    %c0_i32_1 = arith.constant 0 : i32
    return %c0_i32, %c0_i32_0 : i32, i32
  }
  func.func @transform_7(%arg0: i32) -> (i32, i32) {
    %c0_i32 = arith.constant 0 : i32
    %c0_i32_0 = arith.constant 0 : i32
    %c0_i32_1 = arith.constant 0 : i32
    return %c0_i32, %c0_i32_0 : i32, i32
  }
  func.func @transform_8(%arg0: i32) -> (i32, i32) {
    %c0_i32 = arith.constant 0 : i32
    %c0_i32_0 = arith.constant 0 : i32
    return %arg0, %c0_i32 : i32, i32
  }
}

</mosaic_0001>

<llo_original>
// kernel: tpu_custom_call.1
$region0: #{tpu_custom_call.1}
  #allocation0 [shape = 'u32[]', space=smem, size = 0x4, offset = 0x4, fixed_abs, tag = 'smem constant byte address 0x4 - core index']
  #allocation1 [shape = 'u32[144,128]{1,0:T(1,128)}', space=vmem, size = 0x12000, scoped, tag = 'internal scratch']
  %s0 = inlined_call_operand.vmem [shape: bf16[32,4], index: 0, kind: input, shape index: {}]
  %s1 = inlined_call_operand.vmem [shape: f32[2,1,8], index: 1, kind: input, shape index: {}]
  %s2 = inlined_call_operand.vmem [shape: bf16[20,8], index: 2, kind: input, shape index: {}]
  %s3 = inlined_call_operand.vmem [shape: bf16[40,8], index: 3, kind: input, shape index: {}]
  %s4 = inlined_call_operand.vmem [shape: bf16[8,384], index: 4, kind: input, shape index: {}]
  %s5 = inlined_call_operand.vmem [shape: bf16[128,8], index: 5, kind: input, shape index: {}]
  %s6 = inlined_call_operand.vmem [shape: bf16[4,8], index: 6, kind: input, shape index: {}]
  %s7 = inlined_call_operand.vmem [shape: f32[8,8], index: 7, kind: input, shape index: {}]
  %s8 = inlined_call_operand.vmem [shape: f32[32,8], index: 8, kind: output, shape index: {}]
  %s9 = sld [smem:[#allocation0]]
  $region65: #{tpu_custom_call.1} parent=0
    _
  %s11 = ssub.s32 1, %s9
  %s12 = scalar_select 0, %s11, %s9
  loop: start=0, step=1, limit=4
  $region2: #{tpu_custom_call.1} parent=0 // loop_pre_header
    _
  $region3: #{tpu_custom_call.1} parent=0 // loop_header
    %s14 = sphi 0, %s18
    %p15 = scmp.ge.s32.totalorder %s14, 4
    %s24 = sphi 0, %s26
    %s27 = sphi 0, %s24
    %s28 = sphi 0, %s27
    %s44 = sphi 0, %s28
    %s50 = sphi 0, %s52
    %s53 = sphi 0, %s50
    %s54 = sphi 0, %s53
    %s70 = sphi 0, %s54
    %s74 = sphi 0, %s74
    %s76 = sphi 0, %s74
    %s77 = sphi 0, %s76
    %s91 = sphi 0, %s77
    %s95 = sphi 0, %s95
    %s97 = sphi 0, %s95
    %s98 = sphi 0, %s97
    %s112 = sphi 0, %s98
    %s116 = sphi 0, %s116
    %s118 = sphi 0, %s116
    %s119 = sphi 0, %s118
    %s133 = sphi 0, %s119
    %s137 = sphi 0, %s137
    %s139 = sphi 0, %s137
    %s140 = sphi 0, %s139
    %s154 = sphi 0, %s140
    %s158 = sphi 0, %s158
    %s160 = sphi 0, %s158
    %s161 = sphi 0, %s160
    %s175 = sphi 0, %s161
    %s179 = sphi 0, %s179
    %s181 = sphi 0, %s179
    %s182 = sphi 0, %s181
    %s196 = sphi 0, %s182
    %s202 = sphi 0, %s204
    %s205 = sphi 0, %s202
    %s206 = sphi 0, %s205
    %s222 = sphi 0, %s206
  $region4: #{tpu_custom_call.1} parent=0 // loop_header_branch
    %17 = sbr.rel (%p15) target = $region8
  $region5: #{tpu_custom_call.1} parent=0 // loop_body
    %s19 = ssub.s32 %s14, 1
    %s20 = ssub.s32 %s14, 2
    %s21 = sadd.s32 %s14, 1
    %s22 = ssub.s32 %s14, %s21
    %p23 = scmp.eq.s32.totalorder %s22, 0
    %s25 = sadd.s32 %s24, 1
    %s26 = scalar_select %p23, %s24, %s25
    %p29 = pneg %p23
    %p30 = scmp.eq.s32.totalorder %s14, 1
    %p31 = por %p29, %p30
    %p32 = scmp.ne.s32.totalorder %s24, %s27
    %p33 = scmp.eq.s32.totalorder %s14, 0
    %p34 = por %p32, %p33
    %p35 = scmp.ne.s32.totalorder %s24, %s27
    %p36 = scmp.eq.s32.totalorder %s19, 1
    %p37 = por %p35, %p36
    %p38 = scmp.ne.s32.totalorder %s27, %s28
    %p39 = scmp.eq.s32.totalorder %s19, 0
    %p40 = por %p38, %p39
    %p41 = scmp.ne.s32.totalorder %s27, %s28
    %p42 = scmp.eq.s32.totalorder %s20, 1
    %p43 = por %p41, %p42
    %p45 = scmp.ne.s32.totalorder %s28, %s44
    %p46 = scmp.eq.s32.totalorder %s20, 0
    %p47 = por %p45, %p46
    %s48 = ssub.s32 %s14, %s21
    %p49 = scmp.eq.s32.totalorder %s48, 0
    %s51 = sadd.s32 %s50, 1
    %s52 = scalar_select %p49, %s50, %s51
    %p55 = pneg %p49
    %p56 = scmp.eq.s32.totalorder %s14, 1
    %p57 = por %p55, %p56
    %p58 = scmp.ne.s32.totalorder %s50, %s53
    %p59 = scmp.eq.s32.totalorder %s14, 0
    %p60 = por %p58, %p59
    %p61 = scmp.ne.s32.totalorder %s50, %s53
    %p62 = scmp.eq.s32.totalorder %s19, 1
    %p63 = por %p61, %p62
    %p64 = scmp.ne.s32.totalorder %s53, %s54
    %p65 = scmp.eq.s32.totalorder %s19, 0
    %p66 = por %p64, %p65
    %p67 = scmp.ne.s32.totalorder %s53, %s54
    %p68 = scmp.eq.s32.totalorder %s20, 1
    %p69 = por %p67, %p68
    %p71 = scmp.ne.s32.totalorder %s54, %s70
    %p72 = scmp.eq.s32.totalorder %s20, 0
    %p73 = por %p71, %p72
    %s75 = sadd.s32 %s74, 1
    %p78 = scmp.eq.s32.totalorder %s14, 1
    %p79 = scmp.ne.s32.totalorder %s74, %s76
    %p80 = scmp.eq.s32.totalorder %s14, 0
    %p81 = por %p79, %p80
    %p82 = scmp.ne.s32.totalorder %s74, %s76
    %p83 = scmp.eq.s32.totalorder %s19, 1
    %p84 = por %p82, %p83
    %p85 = scmp.ne.s32.totalorder %s76, %s77
    %p86 = scmp.eq.s32.totalorder %s19, 0
    %p87 = por %p85, %p86
    %p88 = scmp.ne.s32.totalorder %s76, %s77
    %p89 = scmp.eq.s32.totalorder %s20, 1
    %p90 = por %p88, %p89
    %p92 = scmp.ne.s32.totalorder %s77, %s91
    %p93 = scmp.eq.s32.totalorder %s20, 0
    %p94 = por %p92, %p93
    %s96 = sadd.s32 %s95, 1
    %p99 = scmp.eq.s32.totalorder %s14, 1
    %p100 = scmp.ne.s32.totalorder %s95, %s97
    %p101 = scmp.eq.s32.totalorder %s14, 0
    %p102 = por %p100, %p101
    %p103 = scmp.ne.s32.totalorder %s95, %s97
    %p104 = scmp.eq.s32.totalorder %s19, 1
    %p105 = por %p103, %p104
    %p106 = scmp.ne.s32.totalorder %s97, %s98
    %p107 = scmp.eq.s32.totalorder %s19, 0
    %p108 = por %p106, %p107
    %p109 = scmp.ne.s32.totalorder %s97, %s98
    %p110 = scmp.eq.s32.totalorder %s20, 1
    %p111 = por %p109, %p110
    %p113 = scmp.ne.s32.totalorder %s98, %s112
    %p114 = scmp.eq.s32.totalorder %s20, 0
    %p115 = por %p113, %p114
    %s117 = sadd.s32 %s116, 1
    %p120 = scmp.eq.s32.totalorder %s14, 1
    %p121 = scmp.ne.s32.totalorder %s116, %s118
    %p122 = scmp.eq.s32.totalorder %s14, 0
    %p123 = por %p121, %p122
    %p124 = scmp.ne.s32.totalorder %s116, %s118
    %p125 = scmp.eq.s32.totalorder %s19, 1
    %p126 = por %p124, %p125
    %p127 = scmp.ne.s32.totalorder %s118, %s119
    %p128 = scmp.eq.s32.totalorder %s19, 0
    %p129 = por %p127, %p128
    %p130 = scmp.ne.s32.totalorder %s118, %s119
    %p131 = scmp.eq.s32.totalorder %s20, 1
    %p132 = por %p130, %p131
    %p134 = scmp.ne.s32.totalorder %s119, %s133
    %p135 = scmp.eq.s32.totalorder %s20, 0
    %p136 = por %p134, %p135
    %s138 = sadd.s32 %s137, 1
    %p141 = scmp.eq.s32.totalorder %s14, 1
    %p142 = scmp.ne.s32.totalorder %s137, %s139
    %p143 = scmp.eq.s32.totalorder %s14, 0
    %p144 = por %p142, %p143
    %p145 = scmp.ne.s32.totalorder %s137, %s139
    %p146 = scmp.eq.s32.totalorder %s19, 1
    %p147 = por %p145, %p146
    %p148 = scmp.ne.s32.totalorder %s139, %s140
    %p149 = scmp.eq.s32.totalorder %s19, 0
    %p150 = por %p148, %p149
    %p151 = scmp.ne.s32.totalorder %s139, %s140
    %p152 = scmp.eq.s32.totalorder %s20, 1
    %p153 = por %p151, %p152
    %p155 = scmp.ne.s32.totalorder %s140, %s154
    %p156 = scmp.eq.s32.totalorder %s20, 0
    %p157 = por %p155, %p156
    %s159 = sadd.s32 %s158, 1
    %p162 = scmp.eq.s32.totalorder %s14, 1
    %p163 = scmp.ne.s32.totalorder %s158, %s160
    %p164 = scmp.eq.s32.totalorder %s14, 0
    %p165 = por %p163, %p164
    %p166 = scmp.ne.s32.totalorder %s158, %s160
    %p167 = scmp.eq.s32.totalorder %s19, 1
    %p168 = por %p166, %p167
    %p169 = scmp.ne.s32.totalorder %s160, %s161
    %p170 = scmp.eq.s32.totalorder %s19, 0
    %p171 = por %p169, %p170
    %p172 = scmp.ne.s32.totalorder %s160, %s161
    %p173 = scmp.eq.s32.totalorder %s20, 1
    %p174 = por %p172, %p173
    %p176 = scmp.ne.s32.totalorder %s161, %s175
    %p177 = scmp.eq.s32.totalorder %s20, 0
    %p178 = por %p176, %p177
    %s180 = sadd.s32 %s179, 1
    %p183 = scmp.eq.s32.totalorder %s14, 1
    %p184 = scmp.ne.s32.totalorder %s179, %s181
    %p185 = scmp.eq.s32.totalorder %s14, 0
    %p186 = por %p184, %p185
    %p187 = scmp.ne.s32.totalorder %s179, %s181
    %p188 = scmp.eq.s32.totalorder %s19, 1
    %p189 = por %p187, %p188
    %p190 = scmp.ne.s32.totalorder %s181, %s182
    %p191 = scmp.eq.s32.totalorder %s19, 0
    %p192 = por %p190, %p191
    %p193 = scmp.ne.s32.totalorder %s181, %s182
    %p194 = scmp.eq.s32.totalorder %s20, 1
    %p195 = por %p193, %p194
    %p197 = scmp.ne.s32.totalorder %s182, %s196
    %p198 = scmp.eq.s32.totalorder %s20, 0
    %p199 = por %p197, %p198
    %s200 = ssub.s32 %s14, %s21
    %p201 = scmp.eq.s32.totalorder %s200, 0
    %s203 = sadd.s32 %s202, 1
    %s204 = scalar_select %p201, %s202, %s203
    %p207 = pneg %p201
    %p208 = scmp.eq.s32.totalorder %s14, 1
    %p209 = por %p207, %p208
    %p210 = scmp.ne.s32.totalorder %s202, %s205
    %p211 = scmp.eq.s32.totalorder %s14, 0
    %p212 = por %p210, %p211
    %p213 = scmp.ne.s32.totalorder %s202, %s205
    %p214 = scmp.eq.s32.totalorder %s19, 1
    %p215 = por %p213, %p214
    %p216 = scmp.ne.s32.totalorder %s205, %s206
    %p217 = scmp.eq.s32.totalorder %s19, 0
    %p218 = por %p216, %p217
    %p219 = scmp.ne.s32.totalorder %s205, %s206
    %p220 = scmp.eq.s32.totalorder %s20, 1
    %p221 = por %p219, %p220
    %p223 = scmp.ne.s32.totalorder %s206, %s222
    %p224 = scmp.eq.s32.totalorder %s20, 0
    %p225 = por %p223, %p224
    %p226 = scmp.le.s32.totalorder 1, %s14
    %p227 = scmp.lt.s32.totalorder %s14, 3
    %p228 = pnand %p226, %p227
    %p229 = pneg %p228
    // Predicated region
    $region9: #{tpu_custom_call.1} parent=5 // pred_check
      _
    $region10: #{tpu_custom_call.1} parent=5 // pred_check_branch
      %231 = sbr.rel (%p228) target = $region12
    $region11: #{tpu_custom_call.1} parent=5 // pred_region
      %s232 = ssub.s32 %s14, 1
      // Predicated region
      $region13: #{tpu_custom_call.1} parent=11 // pred_check
        %p233 = pneg %p87
      $region14: #{tpu_custom_call.1} parent=11 // pred_check_branch
        %235 = sbr.rel (%p233) target = $region16
      $region15: #{tpu_custom_call.1} parent=11 // pred_region
        _
      $region16: #{tpu_custom_call.1} parent=11 // pred_fallthru
        _
      // Predicated region
      $region17: #{tpu_custom_call.1} parent=11 // pred_check
        %p236 = pneg %p108
      $region18: #{tpu_custom_call.1} parent=11 // pred_check_branch
        %238 = sbr.rel (%p236) target = $region20
      $region19: #{tpu_custom_call.1} parent=11 // pred_region
        _
      $region20: #{tpu_custom_call.1} parent=11 // pred_fallthru
        _
      // Predicated region
      $region21: #{tpu_custom_call.1} parent=11 // pred_check
        %p239 = pneg %p129
      $region22: #{tpu_custom_call.1} parent=11 // pred_check_branch
        %241 = sbr.rel (%p239) target = $region24
      $region23: #{tpu_custom_call.1} parent=11 // pred_region
        _
      $region24: #{tpu_custom_call.1} parent=11 // pred_fallthru
        _
      // Predicated region
      $region25: #{tpu_custom_call.1} parent=11 // pred_check
        %p242 = pneg %p150
      $region26: #{tpu_custom_call.1} parent=11 // pred_check_branch
        %244 = sbr.rel (%p242) target = $region28
      $region27: #{tpu_custom_call.1} parent=11 // pred_region
        _
      $region28: #{tpu_custom_call.1} parent=11 // pred_fallthru
        _
      // Predicated region
      $region29: #{tpu_custom_call.1} parent=11 // pred_check
        %p245 = pneg %p171
      $region30: #{tpu_custom_call.1} parent=11 // pred_check_branch
        %247 = sbr.rel (%p245) target = $region32
      $region31: #{tpu_custom_call.1} parent=11 // pred_region
        _
      $region32: #{tpu_custom_call.1} parent=11 // pred_fallthru
        _
      // Predicated region
      $region33: #{tpu_custom_call.1} parent=11 // pred_check
        %p248 = pneg %p192
      $region34: #{tpu_custom_call.1} parent=11 // pred_check_branch
        %250 = sbr.rel (%p248) target = $region36
      $region35: #{tpu_custom_call.1} parent=11 // pred_region
        _
      $region36: #{tpu_custom_call.1} parent=11 // pred_fallthru
        _
    $region12: #{tpu_custom_call.1} parent=5 // pred_fallthru
      _
    %p251 = scmp.lt.s32.totalorder %s14, 2
    // Predicated region
    $region37: #{tpu_custom_call.1} parent=5 // pred_check
      %p252 = pneg %p251
    $region38: #{tpu_custom_call.1} parent=5 // pred_check_branch
      %254 = sbr.rel (%p252) target = $region40
    $region39: #{tpu_custom_call.1} parent=5 // pred_region
      // Predicated region
      $region41: #{tpu_custom_call.1} parent=39 // pred_check
        %p255 = pneg %p34
      $region42: #{tpu_custom_call.1} parent=39 // pred_check_branch
        %257 = sbr.rel (%p255) target = $region44
      $region43: #{tpu_custom_call.1} parent=39 // pred_region
        %s258 = smul.u32 2, %s14
        %p259 = scmp.lt.s32.totalorder %s258, 3
        %s260 = scalar_select %p259, %s258, 3
        %s261 = smul.addr %s260, 4
        %s262 = scalar_lea.vmem %s0, %s261
        %s263 = smul.u32 2, %s14
      $region44: #{tpu_custom_call.1} parent=39 // pred_fallthru
        _
      // Predicated region
      $region45: #{tpu_custom_call.1} parent=39 // pred_check
        %p264 = pneg %p60
      $region46: #{tpu_custom_call.1} parent=39 // pred_check_branch
        %266 = sbr.rel (%p264) target = $region48
      $region47: #{tpu_custom_call.1} parent=39 // pred_region
        %p267 = scmp.lt.s32.totalorder %s14, 1
        %s268 = scalar_select %p267, %s14, 1
        %s269 = scalar_lea.vmem %s1, %s268
      $region48: #{tpu_custom_call.1} parent=39 // pred_fallthru
        _
    $region40: #{tpu_custom_call.1} parent=5 // pred_fallthru
      _
    %p270 = scmp.le.s32.totalorder 1, %s14
    %p271 = scmp.lt.s32.totalorder %s14, 3
    %p272 = pnand %p270, %p271
    %p273 = pneg %p272
    // Predicated region
    $region49: #{tpu_custom_call.1} parent=5 // pred_check
      _
    $region50: #{tpu_custom_call.1} parent=5 // pred_check_branch
      %275 = sbr.rel (%p272) target = $region52
    $region51: #{tpu_custom_call.1} parent=5 // pred_region
      %s276 = ssub.s32 %s14, 1
      %s277 = smul.u32 2, %s19
      %p278 = scmp.lt.s32.totalorder %s277, 3
      %s279 = scalar_select %p278, %s277, 3
      %s280 = smul.addr %s279, 4
      %s281 = scalar_lea.vmem %s0, %s280
      %p282 = pneg %p40
      %p283 = pneg %p37
      %p284 = scmp.lt.s32.totalorder %s19, 1
      %s285 = scalar_select %p284, %s19, 1
      %s286 = scalar_lea.vmem %s1, %s285
      %p287 = pneg %p66
      %p288 = pneg %p63
      %p289 = pneg %p87
      %p290 = pneg %p84
      %p291 = pneg %p108
      %p292 = pneg %p105
      %p293 = pneg %p129
      %p294 = pneg %p126
      %p295 = pneg %p150
      %p296 = pneg %p147
      %p297 = pneg %p171
      %p298 = pneg %p168
      %p299 = pneg %p192
      %p300 = pneg %p189
      %p301 = pneg %p218
      %p302 = pneg %p215
      %s303 = smul.u32 2, %s19
      %p304 = scmp.lt.s32.totalorder %s303, 3
      %s305 = scalar_select %p304, %s303, 3
      %s306 = smul.addr %s305, 8
      %s307 = scalar_lea.vmem %s8, %s306
      %s308 = smul.u32 2, %s19
      %p309 = scmp.lt.s32.totalorder %s308, 3
      %s310 = scalar_select %p309, %s308, 3
      %s311 = smul.addr %s310, 4
      %s312 = scalar_lea.vmem %s0, %s311
      %s313 = smul.u32 2, %s19
      %p314 = scmp.lt.s32.totalorder %s19, 1
      %s315 = scalar_select %p314, %s19, 1
      %s316 = scalar_lea.vmem %s1, %s315
      %s317 = smul.u32 2, %s19
      %p318 = scmp.lt.s32.totalorder %s317, 3
      %s319 = scalar_select %p318, %s317, 3
      %s320 = smul.addr %s319, 8
      %s321 = scalar_lea.vmem %s8, %s320
      %s322 = smul.u32 2, %s19
      %v324 = vld [vmem:[%s312] sm:$0xf]
      %v325 = vld [vmem:[%s312 + $0x4] sm:$0xf]
      %v326 = vunpack.c.l.bf16 %v324
      %v327 = vunpack.c.l.bf16 %v325
      %v328 = vld [vmem:[%s316] sm:$0x1]
      %v329 = vld [vmem:[%s7] sm:$0xff]
      %v330 = vlaneseq
      %v331 = vshrl.u32 %v330, 7
      %v332 = vsub.s32 0, %v331
      %v333 = vrot.slane %v326, %v332
      %v334 = vlaneseq
      %v335 = vshrl.u32 %v334, 7
      %v336 = vsub.s32 7, %v335
      %v337 = vrot.slane %v327, %v336
      %vm340 = vcmask 1041408
      %v341 = vrot.slane %v326, 6
      %v342 = vrot.slane %v327, 6
      %v343 = vsel %vm340, %v341, %v342
      %v347 = vsel %vm340, %v333, %v341
      %v348 = vsel %vm340, %v342, %v337
      %vm351 = vcmask 1046528
      %v352 = vrot.slane %v347, 1
      %v353 = vrot.slane %v343, 1
      %v354 = vsel %vm351, %v352, %v353
      %v355 = vrot.slane %v348, 1
      %v356 = vsel %vm351, %v353, %v355
      %357 = vrot.lane.b32.xlu0 %v354, 4
      %v358 = vpop.permute.xlu0 %357
      %359 = vrot.lane.b32.xlu0 %v356, 4
      %v360 = vpop.permute.xlu0 %359
      %vm363 = vcmask 1045504
      %v364 = vrot.slane %v347, 2
      %v365 = vrot.slane %v343, 2
      %v366 = vsel %vm363, %v364, %v365
      %v367 = vrot.slane %v348, 2
      %v368 = vsel %vm363, %v365, %v367
      %369 = vrot.lane.b32.xlu0 %v366, 8
      %v370 = vpop.permute.xlu0 %369
      %371 = vrot.lane.b32.xlu0 %v368, 8
      %v372 = vpop.permute.xlu0 %371
      %vm375 = vcmask 1044480
      %v376 = vrot.slane %v347, 3
      %v377 = vrot.slane %v343, 3
      %v378 = vsel %vm375, %v376, %v377
      %v379 = vrot.slane %v348, 3
      %v380 = vsel %vm375, %v377, %v379
      %381 = vrot.lane.b32.xlu0 %v378, 12
      %v382 = vpop.permute.xlu0 %381
      %383 = vrot.lane.b32.xlu0 %v380, 12
      %v384 = vpop.permute.xlu0 %383
      %vm387 = vcmask 1043456
      %v388 = vrot.slane %v347, 4
      %v389 = vrot.slane %v343, 4
      %v390 = vsel %vm387, %v388, %v389
      %v391 = vrot.slane %v348, 4
      %v392 = vsel %vm387, %v389, %v391
      %393 = vrot.lane.b32.xlu0 %v390, 16
      %v394 = vpop.permute.xlu0 %393
      %395 = vrot.lane.b32.xlu0 %v392, 16
      %v396 = vpop.permute.xlu0 %395
      %vm399 = vcmask 31744
      %v400 = vsel %vm399, %v347, %v358
      %v401 = vsel %vm399, %v343, %v360
      %vm402 = vcmask 64512
      %v403 = vsel %vm402, %v400, %v370
      %v404 = vsel %vm402, %v401, %v372
      %vm405 = vcmask 97280
      %v406 = vsel %vm405, %v403, %v382
      %v407 = vsel %vm405, %v404, %v384
      %vm408 = vcmask 130048
      %v409 = vsel %vm408, %v406, %v394
      %v410 = vsel %vm408, %v407, %v396
      %v411 = vpack.c.bf16 %v410, %v409
      %v412 = vld [vmem:[%s2] sm:$0xf]
      %v413 = vld [vmem:[%s2 + $0x4] sm:$0xf]
      %v414 = vld [vmem:[%s2 + $0x8] sm:$0x3]
      %v415 = vlaneseq
      %v416 = vshrl.u32 %v415, 7
      %v417 = vsub.s32 0, %v416
      %v418 = vrot.slane %v329, %v417
      %v422 = vunpack.c.l.b16 %v412
      %v423 = vunpack.c.l.b16 %v413
      %v424 = vunpack.c.l.b16 %v414
      %v425 = vpack.c.b16 %v423, %v422
      %v426 = vpack.c.b16 %v424, %v424
      %vm428 = vcmask 162816
      %v430 = vsel %vm428, %v411, 0
      %v433 = vsel %vm340, %v426, 0
      %435 = vmatprep.subr.bf16.mxu0 0
      %436 = vmatpush1.bf16.msra.mxu0 0
      %437 = vmatprep.subr.bf16.mxu0 0
      %438 = vmatpush1.bf16.msra.mxu0 0
      %439 = vmatprep.subr.bf16.mxu0 0
      %440 = vmatpush1.bf16.msra.mxu0 0
      %441 = vmatprep.subr.bf16.mxu0 0
      %442 = vmatpush1.bf16.msra.mxu0 0
      %443 = vmatprep.subr.bf16.mxu0 0
      %444 = vmatpush1.bf16.msra.mxu0 0
      %445 = vmatprep.subr.bf16.mxu0 0
      %446 = vmatpush1.bf16.msra.mxu0 0
      %447 = vmatprep.subr.bf16.mxu0 0
      %448 = vmatpush1.bf16.msra.mxu0 %v433
      %449 = vmatprep.subr.bf16.mxu0 0
      %450 = vmatpush1.bf16.msra.mxu0 %v425
      %451 = vmatprep.subr.bf16.mxu0 0
      %452 = vmatpush2.bf16.msra.mxu0 0
      %453 = vmatprep.subr.bf16.mxu0 0
      %454 = vmatpush2.bf16.msra.mxu0 0
      %455 = vmatprep.subr.bf16.mxu0 0
      %456 = vmatpush2.bf16.msra.mxu0 0
      %457 = vmatprep.subr.bf16.mxu0 0
      %458 = vmatpush2.bf16.msra.mxu0 0
      %459 = vmatprep.subr.bf16.mxu0 0
      %460 = vmatpush2.bf16.msra.mxu0 0
      %461 = vmatprep.subr.bf16.mxu0 0
      %462 = vmatpush2.bf16.msra.mxu0 0
      %463 = vmatprep.subr.bf16.mxu0 0
      %464 = vmatpush2.bf16.msra.mxu0 0
      %465 = vmatprep.subr.bf16.mxu0 0
      %466 = vmatpush2.bf16.msra.mxu0 0
      %467 = vmatprep.mubr.bf16.mxu0 0
      %468 = vmatmul.mubr.bf16.gmra.mxu0 %v430
      %v469 = vpop.f32.mrf.mxu0
      %v470 = vadd.f32 %v418, %v469
      %v471 = vpop.f32.mrf.mxu0
      %v472 = vpop.f32.mrf.mxu0
      %v473 = vadd.f32 %v418, %v472
      %v474 = vpop.f32.mrf.mxu0
      %475 = vdwg.mxu0
      %v476 = vsel %vm402, %v470, 0.0
      %v477 = vsel %vm402, %v473, 0.0
      %v478 = vadd.f32 %v476, %v477
      %479 = vadd.xlane.f32.xlu0 %v478
      %v480 = vpop.xlane.xlu0 %479
      %v481 = vrot.slane %v480, 4
      %v482 = vadd.f32 %v480, %v481
      %v483 = vrot.slane %v482, 2
      %v484 = vadd.f32 %v482, %v483
      %v485 = vrot.slane %v484, 1
      %v486 = vadd.f32 %v484, %v485
      %s487 = vtos %v486
      %v488 = vstv %s487
      %v489 = vmul.f32 %v470, %v470
      %v490 = vmul.f32 %v473, %v473
      %v491 = vsel %vm402, %v489, 0.0
      %v492 = vsel %vm402, %v490, 0.0
      %v493 = vadd.f32 %v491, %v492
      %494 = vadd.xlane.f32.xlu0 %v493
      %v495 = vpop.xlane.xlu0 %494
      %v496 = vrot.slane %v495, 4
      %v497 = vadd.f32 %v495, %v496
      %v498 = vrot.slane %v497, 2
      %v499 = vadd.f32 %v497, %v498
      %v500 = vrot.slane %v499, 1
      %v501 = vadd.f32 %v499, %v500
      %s502 = vtos %v501
      %v503 = vstv %s502
      %v504 = vmul.f32 %v488, 0.0078125
      %v505 = vmul.f32 %v503, 0.0078125
      %v506 = vmul.f32 %v504, %v504
      %v507 = vsub.f32 %v505, %v506
      %v508 = vsub.f32 %v470, %v504
      %v509 = vsub.f32 %v473, %v504
      %v510 = vadd.f32 %v507, 1e-05
      %v511 = vrsqrt.pop %v510
      %v512 = vmul.f32 %v508, %v511
      %v513 = vmul.f32 %v509, %v511
      %v514 = vlaneseq
      %v515 = vshrl.u32 %v514, 7
      %v516 = vsub.s32 1, %v515
      %v517 = vrot.slane %v329, %v516
      %v518 = vmul.f32 %v512, %v517
      %v519 = vmul.f32 %v513, %v517
      %v520 = vlaneseq
      %v521 = vshrl.u32 %v520, 7
      %v522 = vsub.s32 2, %v521
      %v523 = vrot.slane %v329, %v522
      %v524 = vadd.f32 %v518, %v523
      %v525 = vadd.f32 %v519, %v523
      %v526 = vmul.f32 %v524, 1.442695
      %v527 = vpow.pop %v526
      %v528 = vmul.f32 %v525, 1.442695
      %v529 = vpow.pop %v528
      %v530 = vadd.f32 %v527, 1.0
      %v531 = vadd.f32 %v529, 1.0
      %v532 = vmul.f32 %v530, %v530
      %v533 = vmul.f32 %v531, %v531
      %v534 = vadd.f32 %v532, 1.0
      %v535 = vadd.f32 %v533, 1.0
      %v536 = vrcp.pop %v534
      %v537 = vmul.f32 2.0, %v536
      %v538 = vrcp.pop %v535
      %v539 = vmul.f32 2.0, %v538
      %v540 = vsub.f32 1.0, %v537
      %v541 = vsub.f32 1.0, %v539
      %v542 = vmul.f32 %v524, %v540
      %v543 = vmul.f32 %v525, %v541
      %v545 = vlaneseq
      %v546 = vshrl.u32 %v545, 7
      %v547 = vsub.s32 0, %v546
      %v548 = vrot.slane %v328, %v547
      %v550 = vadd.f32 %v542, %v548
      %v551 = vadd.f32 %v543, %v548
      %v552 = vlaneseq
      %v553 = vshrl.u32 %v552, 7
      %v554 = vsub.s32 0, %v553
      %v555 = vrot.slane %v550, %v554
      %v556 = vlaneseq
      %v557 = vshrl.u32 %v556, 7
      %v558 = vsub.s32 7, %v557
      %v559 = vrot.slane %v551, %v558
      %v562 = vrot.slane %v550, 6
      %v563 = vrot.slane %v551, 6
      %v564 = vsel %vm340, %v562, %v563
      %v568 = vsel %vm340, %v555, %v562
      %v569 = vsel %vm340, %v563, %v559
      %v572 = vrot.slane %v568, 1
      %v573 = vrot.slane %v564, 1
      %v574 = vsel %vm351, %v572, %v573
      %v575 = vrot.slane %v569, 1
      %v576 = vsel %vm351, %v573, %v575
      %577 = vrot.lane.b32.xlu0 %v574, 8
      %v578 = vpop.permute.xlu0 %577
      %579 = vrot.lane.b32.xlu0 %v576, 8
      %v580 = vpop.permute.xlu0 %579
      %v583 = vrot.slane %v568, 2
      %v584 = vrot.slane %v564, 2
      %v585 = vsel %vm363, %v583, %v584
      %v586 = vrot.slane %v569, 2
      %v587 = vsel %vm363, %v584, %v586
      %588 = vrot.lane.b32.xlu0 %v585, 16
      %v589 = vpop.permute.xlu0 %588
      %590 = vrot.lane.b32.xlu0 %v587, 16
      %v591 = vpop.permute.xlu0 %590
      %v594 = vrot.slane %v568, 3
      %v595 = vrot.slane %v564, 3
      %v596 = vsel %vm375, %v594, %v595
      %v597 = vrot.slane %v569, 3
      %v598 = vsel %vm375, %v595, %v597
      %599 = vrot.lane.b32.xlu0 %v596, 24
      %v600 = vpop.permute.xlu0 %599
      %601 = vrot.lane.b32.xlu0 %v598, 24
      %v602 = vpop.permute.xlu0 %601
      %v605 = vrot.slane %v568, 4
      %v606 = vrot.slane %v564, 4
      %v607 = vsel %vm387, %v605, %v606
      %v608 = vrot.slane %v569, 4
      %v609 = vsel %vm387, %v606, %v608
      %610 = vrot.lane.b32.xlu0 %v607, 32
      %v611 = vpop.permute.xlu0 %610
      %612 = vrot.lane.b32.xlu0 %v609, 32
      %v613 = vpop.permute.xlu0 %612
      %v616 = vsel %vm402, %v568, %v578
      %v617 = vsel %vm402, %v564, %v580
      %v618 = vsel %vm408, %v616, %v589
      %v619 = vsel %vm408, %v617, %v591
      %vm620 = vcmask 195584
      %v621 = vsel %vm620, %v618, %v600
      %v622 = vsel %vm620, %v619, %v602
      %vm623 = vcmask 261120
      %v624 = vsel %vm623, %v621, %v611
      %v625 = vsel %vm623, %v622, %v613
      %v626 = vpack.c.bf16 %v625, %v624
      %v627 = vld [vmem:[%s3] sm:$0xf]
      %v628 = vld [vmem:[%s3 + $0x4] sm:$0xf]
      %v629 = vld [vmem:[%s3 + $0x8] sm:$0xf]
      %v630 = vld [vmem:[%s3 + $0xc] sm:$0xf]
      %v631 = vld [vmem:[%s3 + $0x10] sm:$0xf]
      %v632 = vlaneseq
      %v633 = vshrl.u32 %v632, 7
      %v634 = vsub.s32 3, %v633
      %v635 = vrot.slane %v329, %v634
      %v641 = vunpack.c.l.b16 %v627
      %v642 = vunpack.c.l.b16 %v628
      %v643 = vunpack.c.l.b16 %v629
      %v644 = vunpack.c.l.b16 %v630
      %v645 = vunpack.c.l.b16 %v631
      %v646 = vpack.c.b16 %v642, %v641
      %v647 = vpack.c.b16 %v644, %v643
      %v648 = vpack.c.b16 %v645, %v645
      %vm651 = vcmask 326656
      %v653 = vsel %vm651, %v626, 0
      %v656 = vsel %vm387, %v648, 0
      %658 = vmatprep.subr.bf16.mxu0 0
      %659 = vmatpush1.bf16.msra.mxu0 0
      %660 = vmatprep.subr.bf16.mxu0 0
      %661 = vmatpush1.bf16.msra.mxu0 0
      %662 = vmatprep.subr.bf16.mxu0 0
      %663 = vmatpush1.bf16.msra.mxu0 0
      %664 = vmatprep.subr.bf16.mxu0 0
      %665 = vmatpush1.bf16.msra.mxu0 0
      %666 = vmatprep.subr.bf16.mxu0 0
      %667 = vmatpush1.bf16.msra.mxu0 0
      %668 = vmatprep.subr.bf16.mxu0 0
      %669 = vmatpush1.bf16.msra.mxu0 %v656
      %670 = vmatprep.subr.bf16.mxu0 0
      %671 = vmatpush1.bf16.msra.mxu0 %v647
      %672 = vmatprep.subr.bf16.mxu0 0
      %673 = vmatpush1.bf16.msra.mxu0 %v646
      %674 = vmatprep.subr.bf16.mxu0 0
      %675 = vmatpush2.bf16.msra.mxu0 0
      %676 = vmatprep.subr.bf16.mxu0 0
      %677 = vmatpush2.bf16.msra.mxu0 0
      %678 = vmatprep.subr.bf16.mxu0 0
      %679 = vmatpush2.bf16.msra.mxu0 0
      %680 = vmatprep.subr.bf16.mxu0 0
      %681 = vmatpush2.bf16.msra.mxu0 0
      %682 = vmatprep.subr.bf16.mxu0 0
      %683 = vmatpush2.bf16.msra.mxu0 0
      %684 = vmatprep.subr.bf16.mxu0 0
      %685 = vmatpush2.bf16.msra.mxu0 0
      %686 = vmatprep.subr.bf16.mxu0 0
      %687 = vmatpush2.bf16.msra.mxu0 0
      %688 = vmatprep.subr.bf16.mxu0 0
      %689 = vmatpush2.bf16.msra.mxu0 0
      %690 = vmatprep.mubr.bf16.mxu0 0
      %691 = vmatmul.mubr.bf16.gmra.mxu0 %v653
      %v692 = vpop.f32.mrf.mxu0
      %v693 = vadd.f32 %v635, %v692
      %v694 = vpop.f32.mrf.mxu0
      %v695 = vpop.f32.mrf.mxu0
      %v696 = vadd.f32 %v635, %v695
      %v697 = vpop.f32.mrf.mxu0
      %698 = vdwg.mxu0
      %v699 = vsel %vm402, %v693, 0.0
      %v700 = vsel %vm402, %v696, 0.0
      %v701 = vadd.f32 %v699, %v700
      %702 = vadd.xlane.f32.xlu0 %v701
      %v703 = vpop.xlane.xlu0 %702
      %v704 = vrot.slane %v703, 4
      %v705 = vadd.f32 %v703, %v704
      %v706 = vrot.slane %v705, 2
      %v707 = vadd.f32 %v705, %v706
      %v708 = vrot.slane %v707, 1
      %v709 = vadd.f32 %v707, %v708
      %s710 = vtos %v709
      %v711 = vstv %s710
      %v712 = vmul.f32 %v693, %v693
      %v713 = vmul.f32 %v696, %v696
      %v714 = vsel %vm402, %v712, 0.0
      %v715 = vsel %vm402, %v713, 0.0
      %v716 = vadd.f32 %v714, %v715
      %717 = vadd.xlane.f32.xlu0 %v716
      %v718 = vpop.xlane.xlu0 %717
      %v719 = vrot.slane %v718, 4
      %v720 = vadd.f32 %v718, %v719
      %v721 = vrot.slane %v720, 2
      %v722 = vadd.f32 %v720, %v721
      %v723 = vrot.slane %v722, 1
      %v724 = vadd.f32 %v722, %v723
      %s725 = vtos %v724
      %v726 = vstv %s725
      %v727 = vmul.f32 %v711, 0.0078125
      %v728 = vmul.f32 %v726, 0.0078125
      %v729 = vmul.f32 %v727, %v727
      %v730 = vsub.f32 %v728, %v729
      %v731 = vsub.f32 %v693, %v727
      %v732 = vsub.f32 %v696, %v727
      %v733 = vadd.f32 %v730, 1e-05
      %v734 = vrsqrt.pop %v733
      %v735 = vmul.f32 %v731, %v734
      %v736 = vmul.f32 %v732, %v734
      %v737 = vlaneseq
      %v738 = vshrl.u32 %v737, 7
      %v739 = vsub.s32 4, %v738
      %v740 = vrot.slane %v329, %v739
      %v741 = vmul.f32 %v735, %v740
      %v742 = vmul.f32 %v736, %v740
      %v743 = vlaneseq
      %v744 = vshrl.u32 %v743, 7
      %v745 = vsub.s32 5, %v744
      %v746 = vrot.slane %v329, %v745
      %v747 = vadd.f32 %v741, %v746
      %v748 = vadd.f32 %v742, %v746
      %v749 = vmul.f32 %v747, 1.442695
      %v750 = vpow.pop %v749
      %v751 = vmul.f32 %v748, 1.442695
      %v752 = vpow.pop %v751
      %v753 = vadd.f32 %v750, 1.0
      %v754 = vadd.f32 %v752, 1.0
      %v755 = vmul.f32 %v753, %v753
      %v756 = vmul.f32 %v754, %v754
      %v757 = vadd.f32 %v755, 1.0
      %v758 = vadd.f32 %v756, 1.0
      %v759 = vrcp.pop %v757
      %v760 = vmul.f32 2.0, %v759
      %v761 = vrcp.pop %v758
      %v762 = vmul.f32 2.0, %v761
      %v763 = vsub.f32 1.0, %v760
      %v764 = vsub.f32 1.0, %v762
      %v765 = vmul.f32 %v747, %v763
      %v766 = vmul.f32 %v748, %v764
      %v767 = vpack.c.bf16 %v766, %v765
      %v768 = vld [vmem:[%s4] sm:$0xff]
      %v769 = vld [vmem:[%s4 + $0x8] sm:$0xf]
      %v772 = vunpack.c.l.b16 %v768
      %v773 = vunpack.c.h.b16 %v768
      %v774 = vunpack.c.l.b16 %v769
      %v775 = vpack.c.b16 %v772, %v772
      %v776 = vpack.c.b16 %v773, %v773
      %v777 = vpack.c.b16 %v774, %v774
      %v779 = vsel %vm402, %v767, 0
      %v782 = vsel %vm387, %v775, 0
      %v785 = vsel %vm387, %v776, 0
      %v788 = vsel %vm387, %v777, 0
      %790 = vmatprep.subr.bf16.mxu0 0
      %791 = vmatpush1.bf16.msra.mxu0 0
      %792 = vmatprep.subr.bf16.mxu0 0
      %793 = vmatpush1.bf16.msra.mxu0 0
      %794 = vmatprep.subr.bf16.mxu0 0
      %795 = vmatpush1.bf16.msra.mxu0 0
      %796 = vmatprep.subr.bf16.mxu0 0
      %797 = vmatpush1.bf16.msra.mxu0 0
      %798 = vmatprep.subr.bf16.mxu0 0
      %799 = vmatpush1.bf16.msra.mxu0 0
      %800 = vmatprep.subr.bf16.mxu0 0
      %801 = vmatpush1.bf16.msra.mxu0 0
      %802 = vmatprep.subr.bf16.mxu0 0
      %803 = vmatpush1.bf16.msra.mxu0 0
      %804 = vmatprep.subr.bf16.mxu0 %v785
      %805 = vmatpush1.bf16.msra.mxu0 %v782
      %806 = vmatprep.subr.bf16.mxu0 0
      %807 = vmatpush2.bf16.msra.mxu0 0
      %808 = vmatprep.subr.bf16.mxu0 0
      %809 = vmatpush2.bf16.msra.mxu0 0
      %810 = vmatprep.subr.bf16.mxu0 0
      %811 = vmatpush2.bf16.msra.mxu0 0
      %812 = vmatprep.subr.bf16.mxu0 0
      %813 = vmatpush2.bf16.msra.mxu0 0
      %814 = vmatprep.subr.bf16.mxu0 0
      %815 = vmatpush2.bf16.msra.mxu0 0
      %816 = vmatprep.subr.bf16.mxu0 0
      %817 = vmatpush2.bf16.msra.mxu0 0
      %818 = vmatprep.subr.bf16.mxu0 0
      %819 = vmatpush2.bf16.msra.mxu0 0
      %820 = vmatprep.subr.bf16.mxu0 0
      %821 = vmatpush2.bf16.msra.mxu0 0
      %822 = vmatprep.mubr.bf16.mxu0 0
      %823 = vmatmul.mubr.bf16.gmra.mxu0 %v779
      %v824 = vpop.f32.mrf.mxu0
      %v825 = vadd.f32 0.0, %v824
      %v826 = vpop.f32.mrf.mxu0
      %v827 = vadd.f32 0.0, %v826
      %v828 = vpop.f32.mrf.mxu0
      %v829 = vadd.f32 0.0, %v828
      %v830 = vpop.f32.mrf.mxu0
      %v831 = vadd.f32 0.0, %v830
      %832 = vdwg.mxu0
      %833 = vmatprep.subr.bf16.mxu0 0
      %834 = vmatpush1.bf16.msra.mxu0 0
      %835 = vmatprep.subr.bf16.mxu0 0
      %836 = vmatpush1.bf16.msra.mxu0 0
      %837 = vmatprep.subr.bf16.mxu0 0
      %838 = vmatpush1.bf16.msra.mxu0 0
      %839 = vmatprep.subr.bf16.mxu0 0
      %840 = vmatpush1.bf16.msra.mxu0 0
      %841 = vmatprep.subr.bf16.mxu0 0
      %842 = vmatpush1.bf16.msra.mxu0 0
      %843 = vmatprep.subr.bf16.mxu0 0
      %844 = vmatpush1.bf16.msra.mxu0 0
      %845 = vmatprep.subr.bf16.mxu0 0
      %846 = vmatpush1.bf16.msra.mxu0 0
      %847 = vmatprep.subr.bf16.mxu0 0
      %848 = vmatpush1.bf16.msra.mxu0 %v788
      %849 = vmatprep.subr.bf16.mxu0 0
      %850 = vmatpush2.bf16.msra.mxu0 0
      %851 = vmatprep.subr.bf16.mxu0 0
      %852 = vmatpush2.bf16.msra.mxu0 0
      %853 = vmatprep.subr.bf16.mxu0 0
      %854 = vmatpush2.bf16.msra.mxu0 0
      %855 = vmatprep.subr.bf16.mxu0 0
      %856 = vmatpush2.bf16.msra.mxu0 0
      %857 = vmatprep.subr.bf16.mxu0 0
      %858 = vmatpush2.bf16.msra.mxu0 0
      %859 = vmatprep.subr.bf16.mxu0 0
      %860 = vmatpush2.bf16.msra.mxu0 0
      %861 = vmatprep.subr.bf16.mxu0 0
      %862 = vmatpush2.bf16.msra.mxu0 0
      %863 = vmatprep.subr.bf16.mxu0 0
      %864 = vmatpush2.bf16.msra.mxu0 0
      %865 = vmatprep.mubr.bf16.mxu0 0
      %866 = vmatmul.mubr.bf16.gmra.mxu0 %v779
      %v867 = vpop.f32.mrf.mxu0
      %v868 = vadd.f32 0.0, %v867
      %v869 = vpop.f32.mrf.mxu0
      %v870 = vpop.f32.mrf.mxu0
      %v871 = vadd.f32 0.0, %v870
      %v872 = vpop.f32.mrf.mxu0
      %873 = vdwg.mxu0
      %v874 = vpack.c.bf16 %v829, %v825
      %v875 = vmax.f32 %v827, %v831
      %v876 = vrot.slane %v875, 4
      %v877 = vmax.f32 %v875, %v876
      %v878 = vrot.slane %v877, 2
      %v879 = vmax.f32 %v877, %v878
      %v880 = vrot.slane %v879, 1
      %v881 = vmax.f32 %v879, %v880
      %v882 = vsub.f32 %v827, %v881
      %v883 = vsub.f32 %v831, %v881
      %v884 = vmul.f32 %v882, 1.442695
      %v885 = vpow.pop %v884
      %v886 = vmul.f32 %v883, 1.442695
      %v887 = vpow.pop %v886
      %v888 = vadd.f32 %v885, %v887
      %v889 = vrot.slane %v888, 4
      %v890 = vadd.f32 %v888, %v889
      %v891 = vrot.slane %v890, 2
      %v892 = vadd.f32 %v890, %v891
      %v893 = vrot.slane %v892, 1
      %v894 = vadd.f32 %v892, %v893
      %v895 = vrcp.pop %v894
      %v896 = vmul.f32 %v885, %v895
      %v897 = vmul.f32 %v887, %v895
      %v898 = vpack.c.bf16 %v897, %v896
      %v899 = vpack.c.bf16 %v871, %v868
      %900 = vxpose.xlu0.c.b16.start [1/8] %v898, 128
      %901 = vxpose.xlu0.c.b16.cont [2/8] 0, 128
      %902 = vxpose.xlu0.c.b16.cont [3/8] 0, 128
      %903 = vxpose.xlu0.c.b16.cont [4/8] 0, 128
      %904 = vxpose.xlu0.c.b16.cont [5/8] 0, 128
      %905 = vxpose.xlu0.c.b16.cont [6/8] 0, 128
      %906 = vxpose.xlu0.c.b16.cont [7/8] 0, 128
      %907 = vxpose.xlu0.c.b16.end [8/8] 0, 128
      %v908 = vpop.trf.xlu0
      %v909 = vpop.trf.xlu0
      %v910 = vpop.trf.xlu0
      %v911 = vpop.trf.xlu0
      %v912 = vpop.trf.xlu0
      %v913 = vpop.trf.xlu0
      %v914 = vpop.trf.xlu0
      %v915 = vpop.trf.xlu0
      %v917 = vsel %vm408, %v908, 0
      %v920 = vsel %vm408, %v909, 0
      %922 = vmatprep.subr.bf16.mxu0 0
      %923 = vmatpush1.bf16.msra.mxu0 0
      %924 = vmatprep.subr.bf16.mxu0 0
      %925 = vmatpush1.bf16.msra.mxu0 0
      %926 = vmatprep.subr.bf16.mxu0 0
      %927 = vmatpush1.bf16.msra.mxu0 0
      %928 = vmatprep.subr.bf16.mxu0 0
      %929 = vmatpush1.bf16.msra.mxu0 0
      %930 = vmatprep.subr.bf16.mxu0 0
      %931 = vmatpush1.bf16.msra.mxu0 0
      %932 = vmatprep.subr.bf16.mxu0 0
      %933 = vmatpush1.bf16.msra.mxu0 0
      %934 = vmatprep.subr.bf16.mxu0 0
      %935 = vmatpush1.bf16.msra.mxu0 0
      %936 = vmatprep.subr.bf16.mxu0 0
      %937 = vmatpush1.bf16.msra.mxu0 %v899
      %938 = vmatprep.subr.bf16.mxu0 0
      %939 = vmatpush2.bf16.msra.mxu0 0
      %940 = vmatprep.subr.bf16.mxu0 0
      %941 = vmatpush2.bf16.msra.mxu0 0
      %942 = vmatprep.subr.bf16.mxu0 0
      %943 = vmatpush2.bf16.msra.mxu0 0
      %944 = vmatprep.subr.bf16.mxu0 0
      %945 = vmatpush2.bf16.msra.mxu0 0
      %946 = vmatprep.subr.bf16.mxu0 0
      %947 = vmatpush2.bf16.msra.mxu0 0
      %948 = vmatprep.subr.bf16.mxu0 0
      %949 = vmatpush2.bf16.msra.mxu0 0
      %950 = vmatprep.subr.bf16.mxu0 0
      %951 = vmatpush2.bf16.msra.mxu0 0
      %952 = vmatprep.subr.bf16.mxu0 0
      %953 = vmatpush2.bf16.msra.mxu0 0
      %954 = vmatprep.mubr.bf16.mxu0 0
      %955 = vmatmul.mubr.bf16.gmra.mxu0 %v917
      %v956 = vpop.f32.mrf.mxu0
      %v957 = vadd.f32 0.0, %v956
      %v958 = vpop.f32.mrf.mxu0
      %v959 = vpop.f32.mrf.mxu0
      %v960 = vadd.f32 0.0, %v959
      %v961 = vpop.f32.mrf.mxu0
      %962 = vmatprep.mubr.bf16.mxu0 0
      %963 = vmatmul.mubr.bf16.gmra.mxu0 %v920
      %v964 = vpop.f32.mrf.mxu0
      %v965 = vadd.f32 0.0, %v964
      %v966 = vpop.f32.mrf.mxu0
      %v967 = vpop.f32.mrf.mxu0
      %v968 = vadd.f32 0.0, %v967
      %v969 = vpop.f32.mrf.mxu0
      %970 = vdwg.mxu0
      %v971 = vpack.c.bf16 %v960, %v957
      %v972 = vpack.c.bf16 %v968, %v965
      %v974 = vsel %vm623, %v874, 0
      %976 = vmatprep.subr.bf16.mxu0 0
      %977 = vmatpush1.bf16.msra.mxu0 0
      %978 = vmatprep.subr.bf16.mxu0 0
      %979 = vmatpush1.bf16.msra.mxu0 0
      %980 = vmatprep.subr.bf16.mxu0 0
      %981 = vmatpush1.bf16.msra.mxu0 0
      %982 = vmatprep.subr.bf16.mxu0 0
      %983 = vmatpush1.bf16.msra.mxu0 0
      %984 = vmatprep.subr.bf16.mxu0 0
      %985 = vmatpush1.bf16.msra.mxu0 0
      %986 = vmatprep.subr.bf16.mxu0 0
      %987 = vmatpush1.bf16.msra.mxu0 0
      %988 = vmatprep.subr.bf16.mxu0 0
      %989 = vmatpush1.bf16.msra.mxu0 %v972
      %990 = vmatprep.subr.bf16.mxu0 0
      %991 = vmatpush1.bf16.msra.mxu0 %v971
      %992 = vmatprep.subr.bf16.mxu0 0
      %993 = vmatpush2.bf16.msra.mxu0 0
      %994 = vmatprep.subr.bf16.mxu0 0
      %995 = vmatpush2.bf16.msra.mxu0 0
      %996 = vmatprep.subr.bf16.mxu0 0
      %997 = vmatpush2.bf16.msra.mxu0 0
      %998 = vmatprep.subr.bf16.mxu0 0
      %999 = vmatpush2.bf16.msra.mxu0 0
      %1000 = vmatprep.subr.bf16.mxu0 0
      %1001 = vmatpush2.bf16.msra.mxu0 0
      %1002 = vmatprep.subr.bf16.mxu0 0
      %1003 = vmatpush2.bf16.msra.mxu0 0
      %1004 = vmatprep.subr.bf16.mxu0 0
      %1005 = vmatpush2.bf16.msra.mxu0 0
      %1006 = vmatprep.subr.bf16.mxu0 0
      %1007 = vmatpush2.bf16.msra.mxu0 0
      %1008 = vmatprep.mubr.bf16.mxu0 0
      %1009 = vmatmul.mubr.bf16.gmra.mxu0 %v974
      %v1010 = vpop.f32.mrf.mxu0
      %v1011 = vadd.f32 0.0, %v1010
      %v1012 = vpop.f32.mrf.mxu0
      %v1013 = vpop.f32.mrf.mxu0
      %v1014 = vadd.f32 0.0, %v1013
      %v1015 = vpop.f32.mrf.mxu0
      %1016 = vdwg.mxu0
      %1018 = vrot.lane.b32.xlu0 %v898, 96
      %v1019 = vpop.permute.xlu0 %1018
      %1021 = vxpose.xlu0.c.b16.start [1/8] %v1019, 128
      %1022 = vxpose.xlu0.c.b16.cont [2/8] 0, 128
      %1023 = vxpose.xlu0.c.b16.cont [3/8] 0, 128
      %1024 = vxpose.xlu0.c.b16.cont [4/8] 0, 128
      %1025 = vxpose.xlu0.c.b16.cont [5/8] 0, 128
      %1026 = vxpose.xlu0.c.b16.cont [6/8] 0, 128
      %1027 = vxpose.xlu0.c.b16.cont [7/8] 0, 128
      %1028 = vxpose.xlu0.c.b16.end [8/8] 0, 128
      %v1029 = vpop.trf.xlu0
      %v1030 = vpop.trf.xlu0
      %v1031 = vpop.trf.xlu0
      %v1032 = vpop.trf.xlu0
      %v1033 = vpop.trf.xlu0
      %v1034 = vpop.trf.xlu0
      %v1035 = vpop.trf.xlu0
      %v1036 = vpop.trf.xlu0
      %1038 = vrot.lane.b32.xlu0 %v899, 96
      %v1039 = vpop.permute.xlu0 %1038
      %v1042 = vsel %vm408, %v1029, 0
      %v1045 = vsel %vm408, %v1030, 0
      %1047 = vmatprep.subr.bf16.mxu0 0
      %1048 = vmatpush1.bf16.msra.mxu0 0
      %1049 = vmatprep.subr.bf16.mxu0 0
      %1050 = vmatpush1.bf16.msra.mxu0 0
      %1051 = vmatprep.subr.bf16.mxu0 0
      %1052 = vmatpush1.bf16.msra.mxu0 0
      %1053 = vmatprep.subr.bf16.mxu0 0
      %1054 = vmatpush1.bf16.msra.mxu0 0
      %1055 = vmatprep.subr.bf16.mxu0 0
      %1056 = vmatpush1.bf16.msra.mxu0 0
      %1057 = vmatprep.subr.bf16.mxu0 0
      %1058 = vmatpush1.bf16.msra.mxu0 0
      %1059 = vmatprep.subr.bf16.mxu0 0
      %1060 = vmatpush1.bf16.msra.mxu0 0
      %1061 = vmatprep.subr.bf16.mxu0 0
      %1062 = vmatpush1.bf16.msra.mxu0 %v1039
      %1063 = vmatprep.subr.bf16.mxu0 0
      %1064 = vmatpush2.bf16.msra.mxu0 0
      %1065 = vmatprep.subr.bf16.mxu0 0
      %1066 = vmatpush2.bf16.msra.mxu0 0
      %1067 = vmatprep.subr.bf16.mxu0 0
      %1068 = vmatpush2.bf16.msra.mxu0 0
      %1069 = vmatprep.subr.bf16.mxu0 0
      %1070 = vmatpush2.bf16.msra.mxu0 0
      %1071 = vmatprep.subr.bf16.mxu0 0
      %1072 = vmatpush2.bf16.msra.mxu0 0
      %1073 = vmatprep.subr.bf16.mxu0 0
      %1074 = vmatpush2.bf16.msra.mxu0 0
      %1075 = vmatprep.subr.bf16.mxu0 0
      %1076 = vmatpush2.bf16.msra.mxu0 0
      %1077 = vmatprep.subr.bf16.mxu0 0
      %1078 = vmatpush2.bf16.msra.mxu0 0
      %1079 = vmatprep.mubr.bf16.mxu0 0
      %1080 = vmatmul.mubr.bf16.gmra.mxu0 %v1042
      %v1081 = vpop.f32.mrf.mxu0
      %v1082 = vadd.f32 0.0, %v1081
      %v1083 = vpop.f32.mrf.mxu0
      %v1084 = vpop.f32.mrf.mxu0
      %v1085 = vadd.f32 0.0, %v1084
      %v1086 = vpop.f32.mrf.mxu0
      %1087 = vmatprep.mubr.bf16.mxu0 0
      %1088 = vmatmul.mubr.bf16.gmra.mxu0 %v1045
      %v1089 = vpop.f32.mrf.mxu0
      %v1090 = vadd.f32 0.0, %v1089
      %v1091 = vpop.f32.mrf.mxu0
      %v1092 = vpop.f32.mrf.mxu0
      %v1093 = vadd.f32 0.0, %v1092
      %v1094 = vpop.f32.mrf.mxu0
      %1095 = vdwg.mxu0
      %v1096 = vpack.c.bf16 %v1085, %v1082
      %v1097 = vpack.c.bf16 %v1093, %v1090
      %1099 = vrot.lane.b32.xlu0 %v874, 96
      %v1100 = vpop.permute.xlu0 %1099
      %v1102 = vsel %vm623, %v1100, 0
      %1104 = vmatprep.subr.bf16.mxu0 0
      %1105 = vmatpush1.bf16.msra.mxu0 0
      %1106 = vmatprep.subr.bf16.mxu0 0
      %1107 = vmatpush1.bf16.msra.mxu0 0
      %1108 = vmatprep.subr.bf16.mxu0 0
      %1109 = vmatpush1.bf16.msra.mxu0 0
      %1110 = vmatprep.subr.bf16.mxu0 0
      %1111 = vmatpush1.bf16.msra.mxu0 0
      %1112 = vmatprep.subr.bf16.mxu0 0
      %1113 = vmatpush1.bf16.msra.mxu0 0
      %1114 = vmatprep.subr.bf16.mxu0 0
      %1115 = vmatpush1.bf16.msra.mxu0 0
      %1116 = vmatprep.subr.bf16.mxu0 0
      %1117 = vmatpush1.bf16.msra.mxu0 %v1097
      %1118 = vmatprep.subr.bf16.mxu0 0
      %1119 = vmatpush1.bf16.msra.mxu0 %v1096
      %1120 = vmatprep.subr.bf16.mxu0 0
      %1121 = vmatpush2.bf16.msra.mxu0 0
      %1122 = vmatprep.subr.bf16.mxu0 0
      %1123 = vmatpush2.bf16.msra.mxu0 0
      %1124 = vmatprep.subr.bf16.mxu0 0
      %1125 = vmatpush2.bf16.msra.mxu0 0
      %1126 = vmatprep.subr.bf16.mxu0 0
      %1127 = vmatpush2.bf16.msra.mxu0 0
      %1128 = vmatprep.subr.bf16.mxu0 0
      %1129 = vmatpush2.bf16.msra.mxu0 0
      %1130 = vmatprep.subr.bf16.mxu0 0
      %1131 = vmatpush2.bf16.msra.mxu0 0
      %1132 = vmatprep.subr.bf16.mxu0 0
      %1133 = vmatpush2.bf16.msra.mxu0 0
      %1134 = vmatprep.subr.bf16.mxu0 0
      %1135 = vmatpush2.bf16.msra.mxu0 0
      %1136 = vmatprep.mubr.bf16.mxu0 0
      %1137 = vmatmul.mubr.bf16.gmra.mxu0 %v1102
      %v1138 = vpop.f32.mrf.mxu0
      %v1139 = vadd.f32 0.0, %v1138
      %v1140 = vpop.f32.mrf.mxu0
      %v1141 = vpop.f32.mrf.mxu0
      %v1142 = vadd.f32 0.0, %v1141
      %v1143 = vpop.f32.mrf.mxu0
      %1144 = vdwg.mxu0
      %1145 = vrot.lane.b32.xlu0 %v898, 64
      %v1146 = vpop.permute.xlu0 %1145
      %1148 = vxpose.xlu0.c.b16.start [1/8] %v1146, 128
      %1149 = vxpose.xlu0.c.b16.cont [2/8] 0, 128
      %1150 = vxpose.xlu0.c.b16.cont [3/8] 0, 128
      %1151 = vxpose.xlu0.c.b16.cont [4/8] 0, 128
      %1152 = vxpose.xlu0.c.b16.cont [5/8] 0, 128
      %1153 = vxpose.xlu0.c.b16.cont [6/8] 0, 128
      %1154 = vxpose.xlu0.c.b16.cont [7/8] 0, 128
      %1155 = vxpose.xlu0.c.b16.end [8/8] 0, 128
      %v1156 = vpop.trf.xlu0
      %v1157 = vpop.trf.xlu0
      %v1158 = vpop.trf.xlu0
      %v1159 = vpop.trf.xlu0
      %v1160 = vpop.trf.xlu0
      %v1161 = vpop.trf.xlu0
      %v1162 = vpop.trf.xlu0
      %v1163 = vpop.trf.xlu0
      %1164 = vrot.lane.b32.xlu0 %v899, 64
      %v1165 = vpop.permute.xlu0 %1164
      %v1168 = vsel %vm408, %v1156, 0
      %v1171 = vsel %vm408, %v1157, 0
      %1173 = vmatprep.subr.bf16.mxu0 0
      %1174 = vmatpush1.bf16.msra.mxu0 0
      %1175 = vmatprep.subr.bf16.mxu0 0
      %1176 = vmatpush1.bf16.msra.mxu0 0
      %1177 = vmatprep.subr.bf16.mxu0 0
      %1178 = vmatpush1.bf16.msra.mxu0 0
      %1179 = vmatprep.subr.bf16.mxu0 0
      %1180 = vmatpush1.bf16.msra.mxu0 0
      %1181 = vmatprep.subr.bf16.mxu0 0
      %1182 = vmatpush1.bf16.msra.mxu0 0
      %1183 = vmatprep.subr.bf16.mxu0 0
      %1184 = vmatpush1.bf16.msra.mxu0 0
      %1185 = vmatprep.subr.bf16.mxu0 0
      %1186 = vmatpush1.bf16.msra.mxu0 0
      %1187 = vmatprep.subr.bf16.mxu0 0
      %1188 = vmatpush1.bf16.msra.mxu0 %v1165
      %1189 = vmatprep.subr.bf16.mxu0 0
      %1190 = vmatpush2.bf16.msra.mxu0 0
      %1191 = vmatprep.subr.bf16.mxu0 0
      %1192 = vmatpush2.bf16.msra.mxu0 0
      %1193 = vmatprep.subr.bf16.mxu0 0
      %1194 = vmatpush2.bf16.msra.mxu0 0
      %1195 = vmatprep.subr.bf16.mxu0 0
      %1196 = vmatpush2.bf16.msra.mxu0 0
      %1197 = vmatprep.subr.bf16.mxu0 0
      %1198 = vmatpush2.bf16.msra.mxu0 0
      %1199 = vmatprep.subr.bf16.mxu0 0
      %1200 = vmatpush2.bf16.msra.mxu0 0
      %1201 = vmatprep.subr.bf16.mxu0 0
      %1202 = vmatpush2.bf16.msra.mxu0 0
      %1203 = vmatprep.subr.bf16.mxu0 0
      %1204 = vmatpush2.bf16.msra.mxu0 0
      %1205 = vmatprep.mubr.bf16.mxu0 0
      %1206 = vmatmul.mubr.bf16.gmra.mxu0 %v1168
      %v1207 = vpop.f32.mrf.mxu0
      %v1208 = vadd.f32 0.0, %v1207
      %v1209 = vpop.f32.mrf.mxu0
      %v1210 = vpop.f32.mrf.mxu0
      %v1211 = vadd.f32 0.0, %v1210
      %v1212 = vpop.f32.mrf.mxu0
      %1213 = vmatprep.mubr.bf16.mxu0 0
      %1214 = vmatmul.mubr.bf16.gmra.mxu0 %v1171
      %v1215 = vpop.f32.mrf.mxu0
      %v1216 = vadd.f32 0.0, %v1215
      %v1217 = vpop.f32.mrf.mxu0
      %v1218 = vpop.f32.mrf.mxu0
      %v1219 = vadd.f32 0.0, %v1218
      %v1220 = vpop.f32.mrf.mxu0
      %1221 = vdwg.mxu0
      %v1222 = vpack.c.bf16 %v1211, %v1208
      %v1223 = vpack.c.bf16 %v1219, %v1216
      %1224 = vrot.lane.b32.xlu0 %v874, 64
      %v1225 = vpop.permute.xlu0 %1224
      %v1227 = vsel %vm623, %v1225, 0
      %1229 = vmatprep.subr.bf16.mxu0 0
      %1230 = vmatpush1.bf16.msra.mxu0 0
      %1231 = vmatprep.subr.bf16.mxu0 0
      %1232 = vmatpush1.bf16.msra.mxu0 0
      %1233 = vmatprep.subr.bf16.mxu0 0
      %1234 = vmatpush1.bf16.msra.mxu0 0
      %1235 = vmatprep.subr.bf16.mxu0 0
      %1236 = vmatpush1.bf16.msra.mxu0 0
      %1237 = vmatprep.subr.bf16.mxu0 0
      %1238 = vmatpush1.bf16.msra.mxu0 0
      %1239 = vmatprep.subr.bf16.mxu0 0
      %1240 = vmatpush1.bf16.msra.mxu0 0
      %1241 = vmatprep.subr.bf16.mxu0 0
      %1242 = vmatpush1.bf16.msra.mxu0 %v1223
      %1243 = vmatprep.subr.bf16.mxu0 0
      %1244 = vmatpush1.bf16.msra.mxu0 %v1222
      %1245 = vmatprep.subr.bf16.mxu0 0
      %1246 = vmatpush2.bf16.msra.mxu0 0
      %1247 = vmatprep.subr.bf16.mxu0 0
      %1248 = vmatpush2.bf16.msra.mxu0 0
      %1249 = vmatprep.subr.bf16.mxu0 0
      %1250 = vmatpush2.bf16.msra.mxu0 0
      %1251 = vmatprep.subr.bf16.mxu0 0
      %1252 = vmatpush2.bf16.msra.mxu0 0
      %1253 = vmatprep.subr.bf16.mxu0 0
      %1254 = vmatpush2.bf16.msra.mxu0 0
      %1255 = vmatprep.subr.bf16.mxu0 0
      %1256 = vmatpush2.bf16.msra.mxu0 0
      %1257 = vmatprep.subr.bf16.mxu0 0
      %1258 = vmatpush2.bf16.msra.mxu0 0
      %1259 = vmatprep.subr.bf16.mxu0 0
      %1260 = vmatpush2.bf16.msra.mxu0 0
      %1261 = vmatprep.mubr.bf16.mxu0 0
      %1262 = vmatmul.mubr.bf16.gmra.mxu0 %v1227
      %v1263 = vpop.f32.mrf.mxu0
      %v1264 = vadd.f32 0.0, %v1263
      %v1265 = vpop.f32.mrf.mxu0
      %v1266 = vpop.f32.mrf.mxu0
      %v1267 = vadd.f32 0.0, %v1266
      %v1268 = vpop.f32.mrf.mxu0
      %1269 = vdwg.mxu0
      %1270 = vrot.lane.b32.xlu0 %v898, 32
      %v1271 = vpop.permute.xlu0 %1270
      %1273 = vxpose.xlu0.c.b16.start [1/8] %v1271, 128
      %1274 = vxpose.xlu0.c.b16.cont [2/8] 0, 128
      %1275 = vxpose.xlu0.c.b16.cont [3/8] 0, 128
      %1276 = vxpose.xlu0.c.b16.cont [4/8] 0, 128
      %1277 = vxpose.xlu0.c.b16.cont [5/8] 0, 128
      %1278 = vxpose.xlu0.c.b16.cont [6/8] 0, 128
      %1279 = vxpose.xlu0.c.b16.cont [7/8] 0, 128
      %1280 = vxpose.xlu0.c.b16.end [8/8] 0, 128
      %v1281 = vpop.trf.xlu0
      %v1282 = vpop.trf.xlu0
      %v1283 = vpop.trf.xlu0
      %v1284 = vpop.trf.xlu0
      %v1285 = vpop.trf.xlu0
      %v1286 = vpop.trf.xlu0
      %v1287 = vpop.trf.xlu0
      %v1288 = vpop.trf.xlu0
      %1289 = vrot.lane.b32.xlu0 %v899, 32
      %v1290 = vpop.permute.xlu0 %1289
      %v1293 = vsel %vm408, %v1281, 0
      %v1296 = vsel %vm408, %v1282, 0
      %1298 = vmatprep.subr.bf16.mxu0 0
      %1299 = vmatpush1.bf16.msra.mxu0 0
      %1300 = vmatprep.subr.bf16.mxu0 0
      %1301 = vmatpush1.bf16.msra.mxu0 0
      %1302 = vmatprep.subr.bf16.mxu0 0
      %1303 = vmatpush1.bf16.msra.mxu0 0
      %1304 = vmatprep.subr.bf16.mxu0 0
      %1305 = vmatpush1.bf16.msra.mxu0 0
      %1306 = vmatprep.subr.bf16.mxu0 0
      %1307 = vmatpush1.bf16.msra.mxu0 0
      %1308 = vmatprep.subr.bf16.mxu0 0
      %1309 = vmatpush1.bf16.msra.mxu0 0
      %1310 = vmatprep.subr.bf16.mxu0 0
      %1311 = vmatpush1.bf16.msra.mxu0 0
      %1312 = vmatprep.subr.bf16.mxu0 0
      %1313 = vmatpush1.bf16.msra.mxu0 %v1290
      %1314 = vmatprep.subr.bf16.mxu0 0
      %1315 = vmatpush2.bf16.msra.mxu0 0
      %1316 = vmatprep.subr.bf16.mxu0 0
      %1317 = vmatpush2.bf16.msra.mxu0 0
      %1318 = vmatprep.subr.bf16.mxu0 0
      %1319 = vmatpush2.bf16.msra.mxu0 0
      %1320 = vmatprep.subr.bf16.mxu0 0
      %1321 = vmatpush2.bf16.msra.mxu0 0
      %1322 = vmatprep.subr.bf16.mxu0 0
      %1323 = vmatpush2.bf16.msra.mxu0 0
      %1324 = vmatprep.subr.bf16.mxu0 0
      %1325 = vmatpush2.bf16.msra.mxu0 0
      %1326 = vmatprep.subr.bf16.mxu0 0
      %1327 = vmatpush2.bf16.msra.mxu0 0
      %1328 = vmatprep.subr.bf16.mxu0 0
      %1329 = vmatpush2.bf16.msra.mxu0 0
      %1330 = vmatprep.mubr.bf16.mxu0 0
      %1331 = vmatmul.mubr.bf16.gmra.mxu0 %v1293
      %v1332 = vpop.f32.mrf.mxu0
      %v1333 = vadd.f32 0.0, %v1332
      %v1334 = vpop.f32.mrf.mxu0
      %v1335 = vpop.f32.mrf.mxu0
      %v1336 = vadd.f32 0.0, %v1335
      %v1337 = vpop.f32.mrf.mxu0
      %1338 = vmatprep.mubr.bf16.mxu0 0
      %1339 = vmatmul.mubr.bf16.gmra.mxu0 %v1296
      %v1340 = vpop.f32.mrf.mxu0
      %v1341 = vadd.f32 0.0, %v1340
      %v1342 = vpop.f32.mrf.mxu0
      %v1343 = vpop.f32.mrf.mxu0
      %v1344 = vadd.f32 0.0, %v1343
      %v1345 = vpop.f32.mrf.mxu0
      %1346 = vdwg.mxu0
      %v1347 = vpack.c.bf16 %v1336, %v1333
      %v1348 = vpack.c.bf16 %v1344, %v1341
      %1349 = vrot.lane.b32.xlu0 %v874, 32
      %v1350 = vpop.permute.xlu0 %1349
      %v1352 = vsel %vm623, %v1350, 0
      %1354 = vmatprep.subr.bf16.mxu0 0
      %1355 = vmatpush1.bf16.msra.mxu0 0
      %1356 = vmatprep.subr.bf16.mxu0 0
      %1357 = vmatpush1.bf16.msra.mxu0 0
      %1358 = vmatprep.subr.bf16.mxu0 0
      %1359 = vmatpush1.bf16.msra.mxu0 0
      %1360 = vmatprep.subr.bf16.mxu0 0
      %1361 = vmatpush1.bf16.msra.mxu0 0
      %1362 = vmatprep.subr.bf16.mxu0 0
      %1363 = vmatpush1.bf16.msra.mxu0 0
      %1364 = vmatprep.subr.bf16.mxu0 0
      %1365 = vmatpush1.bf16.msra.mxu0 0
      %1366 = vmatprep.subr.bf16.mxu0 0
      %1367 = vmatpush1.bf16.msra.mxu0 %v1348
      %1368 = vmatprep.subr.bf16.mxu0 0
      %1369 = vmatpush1.bf16.msra.mxu0 %v1347
      %1370 = vmatprep.subr.bf16.mxu0 0
      %1371 = vmatpush2.bf16.msra.mxu0 0
      %1372 = vmatprep.subr.bf16.mxu0 0
      %1373 = vmatpush2.bf16.msra.mxu0 0
      %1374 = vmatprep.subr.bf16.mxu0 0
      %1375 = vmatpush2.bf16.msra.mxu0 0
      %1376 = vmatprep.subr.bf16.mxu0 0
      %1377 = vmatpush2.bf16.msra.mxu0 0
      %1378 = vmatprep.subr.bf16.mxu0 0
      %1379 = vmatpush2.bf16.msra.mxu0 0
      %1380 = vmatprep.subr.bf16.mxu0 0
      %1381 = vmatpush2.bf16.msra.mxu0 0
      %1382 = vmatprep.subr.bf16.mxu0 0
      %1383 = vmatpush2.bf16.msra.mxu0 0
      %1384 = vmatprep.subr.bf16.mxu0 0
      %1385 = vmatpush2.bf16.msra.mxu0 0
      %1386 = vmatprep.mubr.bf16.mxu0 0
      %1387 = vmatmul.mubr.bf16.gmra.mxu0 %v1352
      %v1388 = vpop.f32.mrf.mxu0
      %v1389 = vadd.f32 0.0, %v1388
      %v1390 = vpop.f32.mrf.mxu0
      %v1391 = vpop.f32.mrf.mxu0
      %v1392 = vadd.f32 0.0, %v1391
      %v1393 = vpop.f32.mrf.mxu0
      %1394 = vdwg.mxu0
      %1397 = vrot.lane.b32.xlu0 %v1139, 32
      %v1398 = vpop.permute.xlu0 %1397
      %1399 = vrot.lane.b32.xlu0 %v1142, 32
      %v1400 = vpop.permute.xlu0 %1399
      %1405 = vrot.lane.b32.xlu0 %v1264, 64
      %v1406 = vpop.permute.xlu0 %1405
      %1407 = vrot.lane.b32.xlu0 %v1267, 64
      %v1408 = vpop.permute.xlu0 %1407
      %1413 = vrot.lane.b32.xlu0 %v1389, 96
      %v1414 = vpop.permute.xlu0 %1413
      %1415 = vrot.lane.b32.xlu0 %v1392, 96
      %v1416 = vpop.permute.xlu0 %1415
      %v1419 = vsel %vm623, %v1011, %v1398
      %v1420 = vsel %vm623, %v1014, %v1400
      %vm1421 = vcmask 523264
      %v1422 = vsel %vm1421, %v1419, %v1406
      %v1423 = vsel %vm1421, %v1420, %v1408
      %vm1424 = vcmask 785408
      %v1425 = vsel %vm1424, %v1422, %v1414
      %v1426 = vsel %vm1424, %v1423, %v1416
      %v1427 = vpack.c.bf16 %v1426, %v1425
      %v1428 = vld [vmem:[%s5] sm:$0xf]
      %v1429 = vld [vmem:[%s5 + $0x4] sm:$0xf]
      %v1430 = vld [vmem:[%s5 + $0x8] sm:$0xf]
      %v1431 = vld [vmem:[%s5 + $0xc] sm:$0xf]
      %v1432 = vld [vmem:[%s5 + $0x10] sm:$0xf]
      %v1433 = vld [vmem:[%s5 + $0x14] sm:$0xf]
      %v1434 = vld [vmem:[%s5 + $0x18] sm:$0xf]
      %v1435 = vld [vmem:[%s5 + $0x1c] sm:$0xf]
      %v1436 = vld [vmem:[%s5 + $0x20] sm:$0xf]
      %v1437 = vld [vmem:[%s5 + $0x24] sm:$0xf]
      %v1438 = vld [vmem:[%s5 + $0x28] sm:$0xf]
      %v1439 = vld [vmem:[%s5 + $0x2c] sm:$0xf]
      %v1440 = vld [vmem:[%s5 + $0x30] sm:$0xf]
      %v1441 = vld [vmem:[%s5 + $0x34] sm:$0xf]
      %v1442 = vld [vmem:[%s5 + $0x38] sm:$0xf]
      %v1443 = vld [vmem:[%s5 + $0x3c] sm:$0xf]
      %v1444 = vlaneseq
      %v1445 = vshrl.u32 %v1444, 7
      %v1446 = vsub.s32 6, %v1445
      %v1447 = vrot.slane %v329, %v1446
      %v1464 = vunpack.c.l.b16 %v1428
      %v1465 = vunpack.c.l.b16 %v1429
      %v1466 = vunpack.c.l.b16 %v1430
      %v1467 = vunpack.c.l.b16 %v1431
      %v1468 = vunpack.c.l.b16 %v1432
      %v1469 = vunpack.c.l.b16 %v1433
      %v1470 = vunpack.c.l.b16 %v1434
      %v1471 = vunpack.c.l.b16 %v1435
      %v1472 = vunpack.c.l.b16 %v1436
      %v1473 = vunpack.c.l.b16 %v1437
      %v1474 = vunpack.c.l.b16 %v1438
      %v1475 = vunpack.c.l.b16 %v1439
      %v1476 = vunpack.c.l.b16 %v1440
      %v1477 = vunpack.c.l.b16 %v1441
      %v1478 = vunpack.c.l.b16 %v1442
      %v1479 = vunpack.c.l.b16 %v1443
      %v1480 = vpack.c.b16 %v1465, %v1464
      %v1481 = vpack.c.b16 %v1467, %v1466
      %v1482 = vpack.c.b16 %v1469, %v1468
      %v1483 = vpack.c.b16 %v1471, %v1470
      %v1484 = vpack.c.b16 %v1473, %v1472
      %v1485 = vpack.c.b16 %v1475, %v1474
      %v1486 = vpack.c.b16 %v1477, %v1476
      %v1487 = vpack.c.b16 %v1479, %v1478
      %1496 = vmatprep.subr.bf16.mxu0 0
      %1497 = vmatpush1.bf16.msra.mxu0 %v1487
      %1498 = vmatprep.subr.bf16.mxu0 0
      %1499 = vmatpush1.bf16.msra.mxu0 %v1486
      %1500 = vmatprep.subr.bf16.mxu0 0
      %1501 = vmatpush1.bf16.msra.mxu0 %v1485
      %1502 = vmatprep.subr.bf16.mxu0 0
      %1503 = vmatpush1.bf16.msra.mxu0 %v1484
      %1504 = vmatprep.subr.bf16.mxu0 0
      %1505 = vmatpush1.bf16.msra.mxu0 %v1483
      %1506 = vmatprep.subr.bf16.mxu0 0
      %1507 = vmatpush1.bf16.msra.mxu0 %v1482
      %1508 = vmatprep.subr.bf16.mxu0 0
      %1509 = vmatpush1.bf16.msra.mxu0 %v1481
      %1510 = vmatprep.subr.bf16.mxu0 0
      %1511 = vmatpush1.bf16.msra.mxu0 %v1480
      %1512 = vmatprep.subr.bf16.mxu0 0
      %1513 = vmatpush2.bf16.msra.mxu0 0
      %1514 = vmatprep.subr.bf16.mxu0 0
      %1515 = vmatpush2.bf16.msra.mxu0 0
      %1516 = vmatprep.subr.bf16.mxu0 0
      %1517 = vmatpush2.bf16.msra.mxu0 0
      %1518 = vmatprep.subr.bf16.mxu0 0
      %1519 = vmatpush2.bf16.msra.mxu0 0
      %1520 = vmatprep.subr.bf16.mxu0 0
      %1521 = vmatpush2.bf16.msra.mxu0 0
      %1522 = vmatprep.subr.bf16.mxu0 0
      %1523 = vmatpush2.bf16.msra.mxu0 0
      %1524 = vmatprep.subr.bf16.mxu0 0
      %1525 = vmatpush2.bf16.msra.mxu0 0
      %1526 = vmatprep.subr.bf16.mxu0 0
      %1527 = vmatpush2.bf16.msra.mxu0 0
      %1528 = vmatprep.mubr.bf16.mxu0 0
      %1529 = vmatmul.mubr.bf16.gmra.mxu0 %v1427
      %v1530 = vpop.f32.mrf.mxu0
      %v1531 = vadd.f32 %v1447, %v1530
      %v1532 = vpop.f32.mrf.mxu0
      %v1533 = vpop.f32.mrf.mxu0
      %v1534 = vadd.f32 %v1447, %v1533
      %v1535 = vpop.f32.mrf.mxu0
      %1536 = vdwg.mxu0
      %v1537 = vld [vmem:[%s6] sm:$0x3]
      %v1538 = vlaneseq
      %v1539 = vshrl.u32 %v1538, 7
      %v1540 = vsub.s32 7, %v1539
      %v1541 = vrot.slane %v329, %v1540
      %v1544 = vunpack.c.l.b16 %v324
      %v1545 = vunpack.c.l.b16 %v325
      %v1546 = vpack.c.b16 %v1545, %v1544
      %v1548 = vsel %vm399, %v1546, 0
      %v1551 = vsel %vm340, %v1537, 0
      %1553 = vmatprep.subr.bf16.mxu0 0
      %1554 = vmatpush1.bf16.msra.mxu0 0
      %1555 = vmatprep.subr.bf16.mxu0 0
      %1556 = vmatpush1.bf16.msra.mxu0 0
      %1557 = vmatprep.subr.bf16.mxu0 0
      %1558 = vmatpush1.bf16.msra.mxu0 0
      %1559 = vmatprep.subr.bf16.mxu0 0
      %1560 = vmatpush1.bf16.msra.mxu0 0
      %1561 = vmatprep.subr.bf16.mxu0 0
      %1562 = vmatpush1.bf16.msra.mxu0 0
      %1563 = vmatprep.subr.bf16.mxu0 0
      %1564 = vmatpush1.bf16.msra.mxu0 0
      %1565 = vmatprep.subr.bf16.mxu0 0
      %1566 = vmatpush1.bf16.msra.mxu0 0
      %1567 = vmatprep.subr.bf16.mxu0 0
      %1568 = vmatpush1.bf16.msra.mxu0 %v1551
      %1569 = vmatprep.subr.bf16.mxu0 0
      %1570 = vmatpush2.bf16.msra.mxu0 0
      %1571 = vmatprep.subr.bf16.mxu0 0
      %1572 = vmatpush2.bf16.msra.mxu0 0
      %1573 = vmatprep.subr.bf16.mxu0 0
      %1574 = vmatpush2.bf16.msra.mxu0 0
      %1575 = vmatprep.subr.bf16.mxu0 0
      %1576 = vmatpush2.bf16.msra.mxu0 0
      %1577 = vmatprep.subr.bf16.mxu0 0
      %1578 = vmatpush2.bf16.msra.mxu0 0
      %1579 = vmatprep.subr.bf16.mxu0 0
      %1580 = vmatpush2.bf16.msra.mxu0 0
      %1581 = vmatprep.subr.bf16.mxu0 0
      %1582 = vmatpush2.bf16.msra.mxu0 0
      %1583 = vmatprep.subr.bf16.mxu0 0
      %1584 = vmatpush2.bf16.msra.mxu0 0
      %1585 = vmatprep.mubr.bf16.mxu0 0
      %1586 = vmatmul.mubr.bf16.gmra.mxu0 %v1548
      %v1587 = vpop.f32.mrf.mxu0
      %v1588 = vadd.f32 %v1541, %v1587
      %v1589 = vpop.f32.mrf.mxu0
      %v1590 = vpop.f32.mrf.mxu0
      %v1591 = vadd.f32 %v1541, %v1590
      %v1592 = vpop.f32.mrf.mxu0
      %1593 = vdwg.mxu0
      %v1594 = vadd.f32 %v765, %v1531
      %v1595 = vadd.f32 %v766, %v1534
      %v1596 = vadd.f32 %v1594, %v1588
      %v1597 = vadd.f32 %v1595, %v1591
      %1598 = vst.msk [vmem:[%s321] sm:$0xff] %vm402, %v1596
      %1599 = vst.msk [vmem:[%s321 + $0x8] sm:$0xff] %vm402, %v1597
      %s1600 = smul.u32 2, %s19
      %p1601 = scmp.lt.s32.totalorder %s1600, 3
      %s1602 = scalar_select %p1601, %s1600, 3
      %s1603 = smul.addr %s1602, 8
      %s1604 = scalar_lea.vmem %s8, %s1603
      // Predicated region
      $region53: #{tpu_custom_call.1} parent=51 // pred_check
        %p1605 = pneg %p215
      $region54: #{tpu_custom_call.1} parent=51 // pred_check_branch
        %1607 = sbr.rel (%p1605) target = $region56
      $region55: #{tpu_custom_call.1} parent=51 // pred_region
        %s1608 = smul.u32 2, %s19
      $region56: #{tpu_custom_call.1} parent=51 // pred_fallthru
        _
    $region52: #{tpu_custom_call.1} parent=5 // pred_fallthru
      _
    %p1609 = scmp.le.s32.totalorder 2, %s14
    // Predicated region
    $region57: #{tpu_custom_call.1} parent=5 // pred_check
      %p1610 = pneg %p1609
    $region58: #{tpu_custom_call.1} parent=5 // pred_check_branch
      %1612 = sbr.rel (%p1610) target = $region60
    $region59: #{tpu_custom_call.1} parent=5 // pred_region
      %s1613 = ssub.s32 %s14, 2
      // Predicated region
      $region61: #{tpu_custom_call.1} parent=59 // pred_check
        %p1614 = pneg %p221
      $region62: #{tpu_custom_call.1} parent=59 // pred_check_branch
        %1616 = sbr.rel (%p1614) target = $region64
      $region63: #{tpu_custom_call.1} parent=59 // pred_region
        %s1617 = smul.u32 2, %s20
        %p1618 = scmp.lt.s32.totalorder %s1617, 3
        %s1619 = scalar_select %p1618, %s1617, 3
        %s1620 = smul.addr %s1619, 8
        %s1621 = scalar_lea.vmem %s8, %s1620
      $region64: #{tpu_custom_call.1} parent=59 // pred_fallthru
        _
    $region60: #{tpu_custom_call.1} parent=5 // pred_fallthru
      _
  $region6: #{tpu_custom_call.1} parent=0 // loop_footer
    %s18 = sadd.s32 1, %s14
  $region7: #{tpu_custom_call.1} parent=0 // loop_footer_branch
    %13 = sbr.rel target = $region3
  $region8: #{tpu_custom_call.1} parent=0 // loop_exit
    _

</llo_original>
